<compile_context>
chip_gen: v7x
topology: tpu7x:2x2x1
jax: 0.10.0
libtpu: 0.0.40
codegen_flags: <defaults>
</compile_context>

<pallas_src>
import functools

import jax
import jax.numpy as jnp
from jax.experimental import pallas as pl
from jax.experimental.pallas import tpu as pltpu

# ----------------------------- configuration --------------------------------
TEXT_DIM = 16
MODALITY_DIM = 24
EMBED_DIM = 32
NUM_HEADS = 4
HEAD_DIM = EMBED_DIM // NUM_HEADS
FFN_DIM = EMBED_DIM * 2
LN_EPS = 1e-5


# ------------------------------- kernel -------------------------------------
def _mab_kernel(t_ref, m_ref, p_ref, out_ref, *, offs):
    """One grid step = one batch element: projections, MHA, 2x LayerNorm, FFN."""
    f32 = jnp.float32
    E, H, dh, F = EMBED_DIM, NUM_HEADS, HEAD_DIM, FFN_DIM
    St, Dt = t_ref.shape
    Sm, Dm = m_ref.shape

    def prm(name, rows, cols):
        o = offs[name]
        return p_ref[o:o + rows, 0:cols]          # static slice of the param slab

    t = t_ref[...]                                # (St, Dt)
    m = m_ref[...]                                # (Sm, Dm)

    # Projections.  Text projection is folded into the K/V weights and the
    # 1/sqrt(head_dim) scale is folded into the Q weight/bias (host side).
    mp = jnp.dot(m, prm("wm", Dm, E), preferred_element_type=f32) + prm("bm", 1, E)
    q = jnp.dot(mp, prm("wq", E, E), preferred_element_type=f32) + prm("bq", 1, E)
    k = jnp.dot(t, prm("wk", Dt, E), preferred_element_type=f32) + prm("bk", 1, E)
    v = jnp.dot(t, prm("wv", Dt, E), preferred_element_type=f32) + prm("bv", 1, E)

    # One head-major relayout per tensor, then a single head-batched einsum
    # pair and one batched softmax for all heads.
    q_hm = jnp.stack([q[:, h * dh:(h + 1) * dh] for h in range(H)], axis=0)   # (H, Sm, dh)
    k_hm = jnp.stack([k[:, h * dh:(h + 1) * dh] for h in range(H)], axis=0)   # (H, St, dh)
    v_hm = jnp.stack([v[:, h * dh:(h + 1) * dh] for h in range(H)], axis=0)   # (H, St, dh)

    s = jnp.einsum("hqd,hkd->hqk", q_hm, k_hm, preferred_element_type=f32)    # (H, Sm, St)
    s = s - jnp.max(s, axis=-1, keepdims=True)
    p = jnp.exp(s)
    p = p * pl.reciprocal(jnp.sum(p, axis=-1, keepdims=True), approx=True)
    ctx = jnp.einsum("hqk,hkd->hqd", p, v_hm, preferred_element_type=f32)     # (H, Sm, dh)

    # Output projection accumulated per head against sublane-aligned row
    # blocks of Wo^T -> no lane concatenation of heads.
    wo = prm("wo", E, E)
    attn = prm("bo", 1, E)
    for h in range(H):                                                         # static unroll, H = 4
        attn = attn + jnp.dot(ctx[h], wo[h * dh:(h + 1) * dh, :],
                              preferred_element_type=f32)                     # (Sm, E)

    gamma = prm("g", 1, E)
    beta = prm("b", 1, E)

    def layer_norm(x):
        mu = jnp.mean(x, axis=-1, keepdims=True)
        xc = x - mu
        var = jnp.mean(xc * xc, axis=-1, keepdims=True)
        return xc * jax.lax.rsqrt(var + LN_EPS) * gamma + beta

    x = layer_norm(mp + attn)                                                  # (Sm, E)
    h1 = jnp.dot(x, prm("w1", E, F), preferred_element_type=f32) + prm("b1", 1, F)
    h1 = jnp.maximum(h1, 0.0)                                                  # ReLU
    ffn = jnp.dot(h1, prm("w2", F, E), preferred_element_type=f32) + prm("b2", 1, E)
    out_ref[...] = layer_norm(x + ffn).astype(out_ref.dtype)


# ------------------------- host-side folding + packing -----------------------
def _pack_params(params):
    """Fold (text-proj into K/V, scale into Q) and pack everything into one slab."""
    dh, F = HEAD_DIM, FFN_DIM
    scale = 1.0 / (dh ** 0.5)

    wm_t = params["wm"].T                                   # (Dm, E)
    # K = tp @ Wk.T + bk with tp = t @ Wt.T + bt  =>  K = t @ (Wk Wt).T + (bt Wk.T + bk)
    wk_f = (params["wk"] @ params["wt"]).T                  # (Dt, E)
    wv_f = (params["wv"] @ params["wt"]).T                  # (Dt, E)
    bk_f = params["bt"] @ params["wk"].T + params["bk"]     # (1, E)
    bv_f = params["bt"] @ params["wv"].T + params["bv"]     # (1, E)
    wq_s = params["wq"].T * scale                           # (E, E)
    bq_s = params["bq"] * scale                             # (1, E)

    # Weights first (all row offsets end up 8-sublane-aligned), biases after.
    pieces = [
        ("wm", wm_t), ("wk", wk_f), ("wv", wv_f), ("wq", wq_s),
        ("wo", params["wo"].T), ("w1", params["w1"].T), ("w2", params["w2"].T),
        ("bm", params["bm"]), ("bk", bk_f), ("bv", bv_f), ("bq", bq_s),
        ("bo", params["bo"]), ("g", params["ln_g"]), ("b", params["ln_b"]),
        ("b1", params["b1"]), ("b2", params["b2"]),
    ]
    offs, rows, padded = {}, 0, []
    for name, arr in pieces:
        offs[name] = rows
        rows += arr.shape[0]
        padded.append(jnp.pad(arr, ((0, 0), (0, F - arr.shape[1]))))   # pad cols to 64
    slab = jnp.concatenate(padded, axis=0).astype(jnp.float32)
    pad_r = (-slab.shape[0]) % 8                                       # sublane-align rows
    if pad_r:
        slab = jnp.pad(slab, ((0, pad_r), (0, 0)))
    return slab, offs


# ------------------------------- wrapper -------------------------------------
def multimodal_attention_block(text_feat, modality_feat, params):
    B, St, Dt = text_feat.shape
    _, Sm, Dm = modality_feat.shape
    E = EMBED_DIM

    slab, offs = _pack_params(params)
    kernel = functools.partial(_mab_kernel, offs=offs)

    fn = pl.pallas_call(
        kernel,
        out_shape=jax.ShapeDtypeStruct((B, Sm, E), jnp.float32),
        grid_spec=pltpu.PrefetchScalarGridSpec(
            num_scalar_prefetch=0,
            grid=(B,),                                        # one batch per step
            in_specs=[
                pl.BlockSpec((None, St, Dt), lambda b: (b, 0, 0)),
                pl.BlockSpec((None, Sm, Dm), lambda b: (b, 0, 0)),
                pl.BlockSpec(slab.shape, lambda b: (0, 0)),   # resident param slab
            ],
            out_specs=pl.BlockSpec((None, Sm, E), lambda b: (b, 0, 0)),
        ),
        compiler_params=pltpu.CompilerParams(
            dimension_semantics=("parallel",)),               # v7x: one batch / TensorCore
    )
    return fn(text_feat, modality_feat, slab)


# ------------------------- pure-JAX reference --------------------------------
def reference_forward(text_feat, modality_feat, params):
    tp = text_feat @ params["wt"].T + params["bt"][0]
    mp = modality_feat @ params["wm"].T + params["bm"][0]
    q = mp @ params["wq"].T + params["bq"][0]
    k = tp @ params["wk"].T + params["bk"][0]
    v = tp @ params["wv"].T + params["bv"][0]
    B, Sm, E = q.shape
    St = k.shape[1]
    qh = q.reshape(B, Sm, NUM_HEADS, HEAD_DIM).transpose(0, 2, 1, 3)
    kh = k.reshape(B, St, NUM_HEADS, HEAD_DIM).transpose(0, 2, 1, 3)
    vh = v.reshape(B, St, NUM_HEADS, HEAD_DIM).transpose(0, 2, 1, 3)
    s = jnp.einsum("bhqd,bhkd->bhqk", qh, kh) / (HEAD_DIM ** 0.5)
    p = jax.nn.softmax(s, axis=-1)
    ctx = jnp.einsum("bhqk,bhkd->bhqd", p, vh).transpose(0, 2, 1, 3).reshape(B, Sm, E)
    attn = ctx @ params["wo"].T + params["bo"][0]

    def ln(x):
        mu = x.mean(-1, keepdims=True)
        var = ((x - mu) ** 2).mean(-1, keepdims=True)
        return (x - mu) / jnp.sqrt(var + LN_EPS) * params["ln_g"][0] + params["ln_b"][0]

    x = ln(mp + attn)
    ffn = jnp.maximum(x @ params["w1"].T + params["b1"][0], 0.0) @ params["w2"].T + params["b2"][0]
    return ln(x + ffn)


# --------------------------------- main ---------------------------------------
def make_params(key):
    keys = jax.random.split(key, 20)
    n = lambda k, shape, s=0.05: (jax.random.normal(k, shape, jnp.float32) * s)
    E, Dt, Dm, F = EMBED_DIM, TEXT_DIM, MODALITY_DIM, FFN_DIM
    return {
        "wt": n(keys[0], (E, Dt)), "bt": n(keys[1], (1, E)),
        "wm": n(keys[2], (E, Dm)), "bm": n(keys[3], (1, E)),
        "wq": n(keys[4], (E, E)), "bq": n(keys[5], (1, E)),
        "wk": n(keys[6], (E, E)), "bk": n(keys[7], (1, E)),
        "wv": n(keys[8], (E, E)), "bv": n(keys[9], (1, E)),
        "wo": n(keys[10], (E, E)), "bo": n(keys[11], (1, E)),
        "ln_g": jnp.ones((1, E), jnp.float32),
        "ln_b": jnp.zeros((1, E), jnp.float32),
        "w1": n(keys[12], (F, E)), "b1": n(keys[13], (1, F)),
        "w2": n(keys[14], (E, F)), "b2": n(keys[15], (1, E)),
    }


if __name__ == "__main__":
    key = jax.random.PRNGKey(0)
    kp, kt, km = jax.random.split(key, 3)
    params = make_params(kp)

    B, ST, SM = 2, 8, 8
    text_feat = jax.random.normal(kt, (B, ST, TEXT_DIM), jnp.float32)
    modality_feat = jax.random.normal(km, (B, SM, MODALITY_DIM), jnp.float32)

    out = multimodal_attention_block(text_feat, modality_feat, params)
    out = jax.block_until_ready(out)

    ref = reference_forward(text_feat, modality_feat, params)
    assert out.shape == (B, SM, EMBED_DIM)
    # tolerance covers the approx EUP reciprocal in softmax and host-side
    # weight folding (both change rounding order only; well below 2e-3 here).
    assert jnp.allclose(out, ref, rtol=2e-3, atol=2e-3), "mismatch vs reference"
    print("KERNEL_OK")
</pallas_src>

<mosaic_0001>
module attributes {stable_mosaic.version = 11 : i64} {
  func.func @_mab_kernel(%arg0: i32, %arg1: memref<1x8x16xf32, #tpu.memory_space<vmem>>, %arg2: memref<1x8x24xf32, #tpu.memory_space<vmem>>, %arg3: memref<232x64xf32, #tpu.memory_space<vmem>>, %arg4: memref<1x8x32xf32, #tpu.memory_space<vmem>>) attributes {dimension_semantics = [#tpu.dimension_semantics<parallel>], iteration_bounds = array<i64: 2>, scalar_prefetch = 0 : i64, scratch_operands = 0 : i64, tpu.core_type = #tpu.core_type<tc>, window_params = [{transform_indices = @transform_0, window_bounds = array<i64: 1, 8, 16>}, {transform_indices = @transform_1, window_bounds = array<i64: 1, 8, 24>}, {pipeline_mode = #tpu.pipeline_mode<synchronous>, transform_indices = @transform_2, window_bounds = array<i64: 232, 64>}, {transform_indices = @transform_3, window_bounds = array<i64: 1, 8, 32>}]} {
    %c0 = arith.constant 0 : index
    %c0_0 = arith.constant 0 : index
    %c0_1 = arith.constant 0 : index
    %0 = vector.load %arg1[%c0, %c0_0, %c0_1] : memref<1x8x16xf32, #tpu.memory_space<vmem>>, vector<1x8x16xf32>
    %1 = vector.shape_cast %0 : vector<1x8x16xf32> to vector<8x16xf32>
    %c0_2 = arith.constant 0 : index
    %c0_3 = arith.constant 0 : index
    %c0_4 = arith.constant 0 : index
    %2 = vector.load %arg2[%c0_2, %c0_3, %c0_4] : memref<1x8x24xf32, #tpu.memory_space<vmem>>, vector<1x8x24xf32>
    %3 = vector.shape_cast %2 : vector<1x8x24xf32> to vector<8x24xf32>
    %c0_5 = arith.constant 0 : index
    %c0_6 = arith.constant 0 : index
    %4 = vector.load %arg3[%c0_5, %c0_6] : memref<232x64xf32, #tpu.memory_space<vmem>>, vector<24x32xf32>
    %cst = arith.constant dense<0.000000e+00> : vector<8x32xf32>
    %5 = tpu.matmul %3, %4, %cst {dimension_numbers = #tpu.dot_dimension_numbers<[1], [0], [0], [1], [0, 0, 1, 1], [], []>} : vector<8x24xf32>, vector<24x32xf32>, vector<8x32xf32> -> vector<8x32xf32>
    %c216 = arith.constant 216 : index
    %c0_7 = arith.constant 0 : index
    %6 = vector.load %arg3[%c216, %c0_7] : memref<232x64xf32, #tpu.memory_space<vmem>>, vector<1x32xf32>
    %7 = vector.broadcast %6 : vector<1x32xf32> to vector<8x32xf32>
    %8 = arith.addf %5, %7 : vector<8x32xf32>
    %c56 = arith.constant 56 : index
    %c0_8 = arith.constant 0 : index
    %9 = vector.load %arg3[%c56, %c0_8] : memref<232x64xf32, #tpu.memory_space<vmem>>, vector<32x32xf32>
    %cst_9 = arith.constant dense<0.000000e+00> : vector<8x32xf32>
    %10 = tpu.matmul %8, %9, %cst_9 {dimension_numbers = #tpu.dot_dimension_numbers<[1], [0], [0], [1], [0, 0, 1, 1], [], []>} : vector<8x32xf32>, vector<32x32xf32>, vector<8x32xf32> -> vector<8x32xf32>
    %c219 = arith.constant 219 : index
    %c0_10 = arith.constant 0 : index
    %11 = vector.load %arg3[%c219, %c0_10] : memref<232x64xf32, #tpu.memory_space<vmem>>, vector<1x32xf32>
    %12 = vector.broadcast %11 : vector<1x32xf32> to vector<8x32xf32>
    %13 = arith.addf %10, %12 : vector<8x32xf32>
    %c24 = arith.constant 24 : index
    %c0_11 = arith.constant 0 : index
    %14 = vector.load %arg3[%c24, %c0_11] : memref<232x64xf32, #tpu.memory_space<vmem>>, vector<16x32xf32>
    %cst_12 = arith.constant dense<0.000000e+00> : vector<8x32xf32>
    %15 = tpu.matmul %1, %14, %cst_12 {dimension_numbers = #tpu.dot_dimension_numbers<[1], [0], [0], [1], [0, 0, 1, 1], [], []>} : vector<8x16xf32>, vector<16x32xf32>, vector<8x32xf32> -> vector<8x32xf32>
    %c217 = arith.constant 217 : index
    %c0_13 = arith.constant 0 : index
    %16 = vector.load %arg3[%c217, %c0_13] : memref<232x64xf32, #tpu.memory_space<vmem>>, vector<1x32xf32>
    %17 = vector.broadcast %16 : vector<1x32xf32> to vector<8x32xf32>
    %18 = arith.addf %15, %17 : vector<8x32xf32>
    %c40 = arith.constant 40 : index
    %c0_14 = arith.constant 0 : index
    %19 = vector.load %arg3[%c40, %c0_14] : memref<232x64xf32, #tpu.memory_space<vmem>>, vector<16x32xf32>
    %cst_15 = arith.constant dense<0.000000e+00> : vector<8x32xf32>
    %20 = tpu.matmul %1, %19, %cst_15 {dimension_numbers = #tpu.dot_dimension_numbers<[1], [0], [0], [1], [0, 0, 1, 1], [], []>} : vector<8x16xf32>, vector<16x32xf32>, vector<8x32xf32> -> vector<8x32xf32>
    %c218 = arith.constant 218 : index
    %c0_16 = arith.constant 0 : index
    %21 = vector.load %arg3[%c218, %c0_16] : memref<232x64xf32, #tpu.memory_space<vmem>>, vector<1x32xf32>
    %22 = vector.broadcast %21 : vector<1x32xf32> to vector<8x32xf32>
    %23 = arith.addf %20, %22 : vector<8x32xf32>
    %24 = vector.extract_strided_slice %13 {offsets = [0, 0], sizes = [8, 8], strides = [1, 1]} : vector<8x32xf32> to vector<8x8xf32>
    %25 = vector.extract_strided_slice %13 {offsets = [0, 8], sizes = [8, 8], strides = [1, 1]} : vector<8x32xf32> to vector<8x8xf32>
    %26 = vector.extract_strided_slice %13 {offsets = [0, 16], sizes = [8, 8], strides = [1, 1]} : vector<8x32xf32> to vector<8x8xf32>
    %27 = vector.extract_strided_slice %13 {offsets = [0, 24], sizes = [8, 8], strides = [1, 1]} : vector<8x32xf32> to vector<8x8xf32>
    %28 = vector.shape_cast %24 : vector<8x8xf32> to vector<1x8x8xf32>
    %29 = vector.shape_cast %25 : vector<8x8xf32> to vector<1x8x8xf32>
    %30 = vector.shape_cast %26 : vector<8x8xf32> to vector<1x8x8xf32>
    %31 = vector.shape_cast %27 : vector<8x8xf32> to vector<1x8x8xf32>
    %32 = tpu.concatenate %28, %29, %30, %31 in 0 : vector<1x8x8xf32>, vector<1x8x8xf32>, vector<1x8x8xf32>, vector<1x8x8xf32> -> vector<4x8x8xf32>
    %33 = vector.extract_strided_slice %18 {offsets = [0, 0], sizes = [8, 8], strides = [1, 1]} : vector<8x32xf32> to vector<8x8xf32>
    %34 = vector.extract_strided_slice %18 {offsets = [0, 8], sizes = [8, 8], strides = [1, 1]} : vector<8x32xf32> to vector<8x8xf32>
    %35 = vector.extract_strided_slice %18 {offsets = [0, 16], sizes = [8, 8], strides = [1, 1]} : vector<8x32xf32> to vector<8x8xf32>
    %36 = vector.extract_strided_slice %18 {offsets = [0, 24], sizes = [8, 8], strides = [1, 1]} : vector<8x32xf32> to vector<8x8xf32>
    %37 = vector.shape_cast %33 : vector<8x8xf32> to vector<1x8x8xf32>
    %38 = vector.shape_cast %34 : vector<8x8xf32> to vector<1x8x8xf32>
    %39 = vector.shape_cast %35 : vector<8x8xf32> to vector<1x8x8xf32>
    %40 = vector.shape_cast %36 : vector<8x8xf32> to vector<1x8x8xf32>
    %41 = tpu.concatenate %37, %38, %39, %40 in 0 : vector<1x8x8xf32>, vector<1x8x8xf32>, vector<1x8x8xf32>, vector<1x8x8xf32> -> vector<4x8x8xf32>
    %42 = vector.extract_strided_slice %23 {offsets = [0, 0], sizes = [8, 8], strides = [1, 1]} : vector<8x32xf32> to vector<8x8xf32>
    %43 = vector.extract_strided_slice %23 {offsets = [0, 8], sizes = [8, 8], strides = [1, 1]} : vector<8x32xf32> to vector<8x8xf32>
    %44 = vector.extract_strided_slice %23 {offsets = [0, 16], sizes = [8, 8], strides = [1, 1]} : vector<8x32xf32> to vector<8x8xf32>
    %45 = vector.extract_strided_slice %23 {offsets = [0, 24], sizes = [8, 8], strides = [1, 1]} : vector<8x32xf32> to vector<8x8xf32>
    %46 = vector.shape_cast %42 : vector<8x8xf32> to vector<1x8x8xf32>
    %47 = vector.shape_cast %43 : vector<8x8xf32> to vector<1x8x8xf32>
    %48 = vector.shape_cast %44 : vector<8x8xf32> to vector<1x8x8xf32>
    %49 = vector.shape_cast %45 : vector<8x8xf32> to vector<1x8x8xf32>
    %50 = tpu.concatenate %46, %47, %48, %49 in 0 : vector<1x8x8xf32>, vector<1x8x8xf32>, vector<1x8x8xf32>, vector<1x8x8xf32> -> vector<4x8x8xf32>
    "tpu.trace_start"() <{level = 10 : i32, message = "hqd,hkd->hqk"}> : () -> ()
    %cst_17 = arith.constant dense<0.000000e+00> : vector<4x8x8xf32>
    %51 = tpu.matmul %32, %41, %cst_17 {dimension_numbers = #tpu.dot_dimension_numbers<[2], [2], [1], [1], [0, 0, 0, 1, 1, 1], [0], [0]>} : vector<4x8x8xf32>, vector<4x8x8xf32>, vector<4x8x8xf32> -> vector<4x8x8xf32>
    "tpu.trace_stop"() : () -> ()
    %cst_18 = arith.constant dense<0xFF800000> : vector<4x8xf32>
    %52 = vector.multi_reduction <maximumf>, %51, %cst_18 [2] : vector<4x8x8xf32> to vector<4x8xf32>
    %53 = vector.shape_cast %52 : vector<4x8xf32> to vector<4x8x1xf32>
    %54 = vector.broadcast %53 : vector<4x8x1xf32> to vector<4x8x8xf32>
    %55 = arith.subf %51, %54 : vector<4x8x8xf32>
    %56 = math.exp %55 : vector<4x8x8xf32>
    %cst_19 = arith.constant dense<0.000000e+00> : vector<4x8xf32>
    %57 = vector.multi_reduction <add>, %56, %cst_19 [2] : vector<4x8x8xf32> to vector<4x8xf32>
    %58 = vector.shape_cast %57 : vector<4x8xf32> to vector<4x8x1xf32>
    %59 = tpu.reciprocal %58 {approx = true} : vector<4x8x1xf32> -> vector<4x8x1xf32>
    %60 = vector.broadcast %59 : vector<4x8x1xf32> to vector<4x8x8xf32>
    %61 = arith.mulf %56, %60 : vector<4x8x8xf32>
    "tpu.trace_start"() <{level = 10 : i32, message = "hqk,hkd->hqd"}> : () -> ()
    %cst_20 = arith.constant dense<0.000000e+00> : vector<4x8x8xf32>
    %62 = tpu.matmul %61, %50, %cst_20 {dimension_numbers = #tpu.dot_dimension_numbers<[2], [1], [1], [2], [0, 0, 0, 1, 1, 2], [0], [0]>} : vector<4x8x8xf32>, vector<4x8x8xf32>, vector<4x8x8xf32> -> vector<4x8x8xf32>
    "tpu.trace_stop"() : () -> ()
    %c88 = arith.constant 88 : index
    %c0_21 = arith.constant 0 : index
    %63 = vector.load %arg3[%c88, %c0_21] : memref<232x64xf32, #tpu.memory_space<vmem>>, vector<32x32xf32>
    %c220 = arith.constant 220 : index
    %c0_22 = arith.constant 0 : index
    %64 = vector.load %arg3[%c220, %c0_22] : memref<232x64xf32, #tpu.memory_space<vmem>>, vector<1x32xf32>
    %65 = vector.extract_strided_slice %62 {offsets = [0, 0, 0], sizes = [1, 8, 8], strides = [1, 1, 1]} : vector<4x8x8xf32> to vector<1x8x8xf32>
    %66 = vector.shape_cast %65 : vector<1x8x8xf32> to vector<8x8xf32>
    %67 = vector.extract_strided_slice %63 {offsets = [0, 0], sizes = [8, 32], strides = [1, 1]} : vector<32x32xf32> to vector<8x32xf32>
    %cst_23 = arith.constant dense<0.000000e+00> : vector<8x32xf32>
    %68 = tpu.matmul %66, %67, %cst_23 {dimension_numbers = #tpu.dot_dimension_numbers<[1], [0], [0], [1], [0, 0, 1, 1], [], []>} : vector<8x8xf32>, vector<8x32xf32>, vector<8x32xf32> -> vector<8x32xf32>
    %69 = vector.broadcast %64 : vector<1x32xf32> to vector<8x32xf32>
    %70 = arith.addf %69, %68 : vector<8x32xf32>
    %71 = vector.extract_strided_slice %62 {offsets = [1, 0, 0], sizes = [1, 8, 8], strides = [1, 1, 1]} : vector<4x8x8xf32> to vector<1x8x8xf32>
    %72 = vector.shape_cast %71 : vector<1x8x8xf32> to vector<8x8xf32>
    %73 = vector.extract_strided_slice %63 {offsets = [8, 0], sizes = [8, 32], strides = [1, 1]} : vector<32x32xf32> to vector<8x32xf32>
    %cst_24 = arith.constant dense<0.000000e+00> : vector<8x32xf32>
    %74 = tpu.matmul %72, %73, %cst_24 {dimension_numbers = #tpu.dot_dimension_numbers<[1], [0], [0], [1], [0, 0, 1, 1], [], []>} : vector<8x8xf32>, vector<8x32xf32>, vector<8x32xf32> -> vector<8x32xf32>
    %75 = arith.addf %70, %74 : vector<8x32xf32>
    %76 = vector.extract_strided_slice %62 {offsets = [2, 0, 0], sizes = [1, 8, 8], strides = [1, 1, 1]} : vector<4x8x8xf32> to vector<1x8x8xf32>
    %77 = vector.shape_cast %76 : vector<1x8x8xf32> to vector<8x8xf32>
    %78 = vector.extract_strided_slice %63 {offsets = [16, 0], sizes = [8, 32], strides = [1, 1]} : vector<32x32xf32> to vector<8x32xf32>
    %cst_25 = arith.constant dense<0.000000e+00> : vector<8x32xf32>
    %79 = tpu.matmul %77, %78, %cst_25 {dimension_numbers = #tpu.dot_dimension_numbers<[1], [0], [0], [1], [0, 0, 1, 1], [], []>} : vector<8x8xf32>, vector<8x32xf32>, vector<8x32xf32> -> vector<8x32xf32>
    %80 = arith.addf %75, %79 : vector<8x32xf32>
    %81 = vector.extract_strided_slice %62 {offsets = [3, 0, 0], sizes = [1, 8, 8], strides = [1, 1, 1]} : vector<4x8x8xf32> to vector<1x8x8xf32>
    %82 = vector.shape_cast %81 : vector<1x8x8xf32> to vector<8x8xf32>
    %83 = vector.extract_strided_slice %63 {offsets = [24, 0], sizes = [8, 32], strides = [1, 1]} : vector<32x32xf32> to vector<8x32xf32>
    %cst_26 = arith.constant dense<0.000000e+00> : vector<8x32xf32>
    %84 = tpu.matmul %82, %83, %cst_26 {dimension_numbers = #tpu.dot_dimension_numbers<[1], [0], [0], [1], [0, 0, 1, 1], [], []>} : vector<8x8xf32>, vector<8x32xf32>, vector<8x32xf32> -> vector<8x32xf32>
    %85 = arith.addf %80, %84 : vector<8x32xf32>
    %c221 = arith.constant 221 : index
    %c0_27 = arith.constant 0 : index
    %86 = vector.load %arg3[%c221, %c0_27] : memref<232x64xf32, #tpu.memory_space<vmem>>, vector<1x32xf32>
    %c222 = arith.constant 222 : index
    %c0_28 = arith.constant 0 : index
    %87 = vector.load %arg3[%c222, %c0_28] : memref<232x64xf32, #tpu.memory_space<vmem>>, vector<1x32xf32>
    %88 = arith.addf %8, %85 : vector<8x32xf32>
    %cst_29 = arith.constant dense<0.000000e+00> : vector<8xf32>
    %89 = vector.multi_reduction <add>, %88, %cst_29 [1] : vector<8x32xf32> to vector<8xf32>
    %90 = vector.shape_cast %89 : vector<8xf32> to vector<8x1xf32>
    %cst_30 = arith.constant 3.200000e+01 : f32
    %91 = vector.broadcast %cst_30 : f32 to vector<8x1xf32>
    %92 = arith.divf %90, %91 : vector<8x1xf32>
    %93 = vector.broadcast %92 : vector<8x1xf32> to vector<8x32xf32>
    %94 = arith.subf %88, %93 : vector<8x32xf32>
    %95 = arith.mulf %94, %94 : vector<8x32xf32>
    %cst_31 = arith.constant dense<0.000000e+00> : vector<8xf32>
    %96 = vector.multi_reduction <add>, %95, %cst_31 [1] : vector<8x32xf32> to vector<8xf32>
    %97 = vector.shape_cast %96 : vector<8xf32> to vector<8x1xf32>
    %cst_32 = arith.constant 3.200000e+01 : f32
    %98 = vector.broadcast %cst_32 : f32 to vector<8x1xf32>
    %99 = arith.divf %97, %98 : vector<8x1xf32>
    %cst_33 = arith.constant 9.99999974E-6 : f32
    %100 = vector.broadcast %cst_33 : f32 to vector<8x1xf32>
    %101 = arith.addf %99, %100 : vector<8x1xf32>
    %102 = math.rsqrt %101 : vector<8x1xf32>
    %103 = vector.broadcast %102 : vector<8x1xf32> to vector<8x32xf32>
    %104 = arith.mulf %94, %103 : vector<8x32xf32>
    %105 = vector.broadcast %86 : vector<1x32xf32> to vector<8x32xf32>
    %106 = arith.mulf %104, %105 : vector<8x32xf32>
    %107 = vector.broadcast %87 : vector<1x32xf32> to vector<8x32xf32>
    %108 = arith.addf %106, %107 : vector<8x32xf32>
    %c120 = arith.constant 120 : index
    %c0_34 = arith.constant 0 : index
    %109 = vector.load %arg3[%c120, %c0_34] : memref<232x64xf32, #tpu.memory_space<vmem>>, vector<32x64xf32>
    %cst_35 = arith.constant dense<0.000000e+00> : vector<8x64xf32>
    %110 = tpu.matmul %108, %109, %cst_35 {dimension_numbers = #tpu.dot_dimension_numbers<[1], [0], [0], [1], [0, 0, 1, 1], [], []>} : vector<8x32xf32>, vector<32x64xf32>, vector<8x64xf32> -> vector<8x64xf32>
    %c223 = arith.constant 223 : index
    %c0_36 = arith.constant 0 : index
    %111 = vector.load %arg3[%c223, %c0_36] : memref<232x64xf32, #tpu.memory_space<vmem>>, vector<1x64xf32>
    %112 = vector.broadcast %111 : vector<1x64xf32> to vector<8x64xf32>
    %113 = arith.addf %110, %112 : vector<8x64xf32>
    %cst_37 = arith.constant 0.000000e+00 : f32
    %114 = vector.broadcast %cst_37 : f32 to vector<8x64xf32>
    %115 = arith.maximumf %113, %114 : vector<8x64xf32>
    %c152 = arith.constant 152 : index
    %c0_38 = arith.constant 0 : index
    %116 = vector.load %arg3[%c152, %c0_38] : memref<232x64xf32, #tpu.memory_space<vmem>>, vector<64x32xf32>
    %cst_39 = arith.constant dense<0.000000e+00> : vector<8x32xf32>
    %117 = tpu.matmul %115, %116, %cst_39 {dimension_numbers = #tpu.dot_dimension_numbers<[1], [0], [0], [1], [0, 0, 1, 1], [], []>} : vector<8x64xf32>, vector<64x32xf32>, vector<8x32xf32> -> vector<8x32xf32>
    %c224 = arith.constant 224 : index
    %c0_40 = arith.constant 0 : index
    %118 = vector.load %arg3[%c224, %c0_40] : memref<232x64xf32, #tpu.memory_space<vmem>>, vector<1x32xf32>
    %119 = vector.broadcast %118 : vector<1x32xf32> to vector<8x32xf32>
    %120 = arith.addf %117, %119 : vector<8x32xf32>
    %121 = arith.addf %108, %120 : vector<8x32xf32>
    %cst_41 = arith.constant dense<0.000000e+00> : vector<8xf32>
    %122 = vector.multi_reduction <add>, %121, %cst_41 [1] : vector<8x32xf32> to vector<8xf32>
    %123 = vector.shape_cast %122 : vector<8xf32> to vector<8x1xf32>
    %cst_42 = arith.constant 3.200000e+01 : f32
    %124 = vector.broadcast %cst_42 : f32 to vector<8x1xf32>
    %125 = arith.divf %123, %124 : vector<8x1xf32>
    %126 = vector.broadcast %125 : vector<8x1xf32> to vector<8x32xf32>
    %127 = arith.subf %121, %126 : vector<8x32xf32>
    %128 = arith.mulf %127, %127 : vector<8x32xf32>
    %cst_43 = arith.constant dense<0.000000e+00> : vector<8xf32>
    %129 = vector.multi_reduction <add>, %128, %cst_43 [1] : vector<8x32xf32> to vector<8xf32>
    %130 = vector.shape_cast %129 : vector<8xf32> to vector<8x1xf32>
    %cst_44 = arith.constant 3.200000e+01 : f32
    %131 = vector.broadcast %cst_44 : f32 to vector<8x1xf32>
    %132 = arith.divf %130, %131 : vector<8x1xf32>
    %cst_45 = arith.constant 9.99999974E-6 : f32
    %133 = vector.broadcast %cst_45 : f32 to vector<8x1xf32>
    %134 = arith.addf %132, %133 : vector<8x1xf32>
    %135 = math.rsqrt %134 : vector<8x1xf32>
    %136 = vector.broadcast %135 : vector<8x1xf32> to vector<8x32xf32>
    %137 = arith.mulf %127, %136 : vector<8x32xf32>
    %138 = vector.broadcast %86 : vector<1x32xf32> to vector<8x32xf32>
    %139 = arith.mulf %137, %138 : vector<8x32xf32>
    %140 = vector.broadcast %87 : vector<1x32xf32> to vector<8x32xf32>
    %141 = arith.addf %139, %140 : vector<8x32xf32>
    %c0_46 = arith.constant 0 : index
    %c0_47 = arith.constant 0 : index
    %c0_48 = arith.constant 0 : index
    %142 = vector.load %arg4[%c0_46, %c0_47, %c0_48] : memref<1x8x32xf32, #tpu.memory_space<vmem>>, vector<1x8x32xf32>
    %143 = vector.shape_cast %142 : vector<1x8x32xf32> to vector<8x32xf32>
    %144 = vector.shape_cast %141 : vector<8x32xf32> to vector<1x8x32xf32>
    tpu.vector_store %arg4[%c0_46, %c0_47, %c0_48], %144 {strides = array<i32>} : memref<1x8x32xf32, #tpu.memory_space<vmem>>, vector<1x8x32xf32>,
    return
  }
  func.func @transform_0(%arg0: i32) -> (i32, i32, i32) {
    %c0_i32 = arith.constant 0 : i32
    %c0_i32_0 = arith.constant 0 : i32
    %c0_i32_1 = arith.constant 0 : i32
    return %arg0, %c0_i32, %c0_i32_0 : i32, i32, i32
  }
  func.func @transform_1(%arg0: i32) -> (i32, i32, i32) {
    %c0_i32 = arith.constant 0 : i32
    %c0_i32_0 = arith.constant 0 : i32
    %c0_i32_1 = arith.constant 0 : i32
    return %arg0, %c0_i32, %c0_i32_0 : i32, i32, i32
  }
  func.func @transform_2(%arg0: i32) -> (i32, i32) {
    %c0_i32 = arith.constant 0 : i32
    %c0_i32_0 = arith.constant 0 : i32
    %c0_i32_1 = arith.constant 0 : i32
    return %c0_i32, %c0_i32_0 : i32, i32
  }
  func.func @transform_3(%arg0: i32) -> (i32, i32, i32) {
    %c0_i32 = arith.constant 0 : i32
    %c0_i32_0 = arith.constant 0 : i32
    %c0_i32_1 = arith.constant 0 : i32
    return %arg0, %c0_i32, %c0_i32_0 : i32, i32, i32
  }
}

</mosaic_0001>

<llo_original>
// kernel: tpu_custom_call.1
$region0: #{tpu_custom_call.1}
  #allocation0 [shape = 'u32[]', space=smem, size = 0x4, offset = 0x4, fixed_abs, tag = 'smem constant byte address 0x4 - core index']
  #allocation1 [shape = 'u32[144,128]{1,0:T(1,128)}', space=vmem, size = 0x12000, scoped, tag = 'internal scratch']
  %s0 = inlined_call_operand.vmem [shape: f32[2,8,16], index: 0, kind: input, shape index: {}]
  %s1 = inlined_call_operand.vmem [shape: f32[2,8,24], index: 1, kind: input, shape index: {}]
  %s2 = inlined_call_operand.vmem [shape: f32[232,64], index: 2, kind: input, shape index: {}]
  %s3 = inlined_call_operand.hbm [shape: f32[2,8,32], index: 3, kind: output, shape index: {}]
  %s4 = sld [smem:[#allocation0]]
  $region45: #{tpu_custom_call.1} parent=0
    _
  %s6 = ssub.s32 1, %s4
  %s7 = scalar_select 0, %s6, %s4
  $region1: #{tpu_custom_call.1} parent=0
    #allocation2 [shape = 'u8[8192]{0}', space=vmem, size = 0x2000, scoped, tag = 'output window, operand 0']
    #allocation3 [shape = 's32[2]{0}', space=sflag, size = 0x8, scoped, tag = 'scoped memory for tpu_custom_call.1']
    %8 = vsyncpa [#allocation3], 0
    %s9 = scalar_lea.sflag [#allocation3], 1
    %10 = vsyncpa %s9, 0
    loop: start=0, step=1, limit=4
    $region2: #{tpu_custom_call.1} parent=1 // loop_pre_header
      _
    $region3: #{tpu_custom_call.1} parent=1 // loop_header
      %s12 = sphi 0, %s16
      %p13 = scmp.ge.s32.totalorder %s12, 4
      %s22 = sphi 0, %s24
      %s25 = sphi 0, %s22
      %s26 = sphi 0, %s25
      %s42 = sphi 0, %s26
      %s48 = sphi 0, %s50
      %s51 = sphi 0, %s48
      %s52 = sphi 0, %s51
      %s68 = sphi 0, %s52
      %s72 = sphi 0, %s72
      %s74 = sphi 0, %s72
      %s75 = sphi 0, %s74
      %s89 = sphi 0, %s75
      %s95 = sphi 0, %s97
      %s98 = sphi 0, %s95
      %s99 = sphi 0, %s98
      %s115 = sphi 0, %s99
    $region4: #{tpu_custom_call.1} parent=1 // loop_header_branch
      %15 = sbr.rel (%p13) target = $region8
    $region5: #{tpu_custom_call.1} parent=1 // loop_body
      %s17 = ssub.s32 %s12, 1
      %s18 = ssub.s32 %s12, 2
      %s19 = sadd.s32 %s12, 1
      %s20 = ssub.s32 %s12, %s19
      %p21 = scmp.eq.s32.totalorder %s20, 0
      %s23 = sadd.s32 %s22, 1
      %s24 = scalar_select %p21, %s22, %s23
      %p27 = pneg %p21
      %p28 = scmp.eq.s32.totalorder %s12, 1
      %p29 = por %p27, %p28
      %p30 = scmp.ne.s32.totalorder %s22, %s25
      %p31 = scmp.eq.s32.totalorder %s12, 0
      %p32 = por %p30, %p31
      %p33 = scmp.ne.s32.totalorder %s22, %s25
      %p34 = scmp.eq.s32.totalorder %s17, 1
      %p35 = por %p33, %p34
      %p36 = scmp.ne.s32.totalorder %s25, %s26
      %p37 = scmp.eq.s32.totalorder %s17, 0
      %p38 = por %p36, %p37
      %p39 = scmp.ne.s32.totalorder %s25, %s26
      %p40 = scmp.eq.s32.totalorder %s18, 1
      %p41 = por %p39, %p40
      %p43 = scmp.ne.s32.totalorder %s26, %s42
      %p44 = scmp.eq.s32.totalorder %s18, 0
      %p45 = por %p43, %p44
      %s46 = ssub.s32 %s12, %s19
      %p47 = scmp.eq.s32.totalorder %s46, 0
      %s49 = sadd.s32 %s48, 1
      %s50 = scalar_select %p47, %s48, %s49
      %p53 = pneg %p47
      %p54 = scmp.eq.s32.totalorder %s12, 1
      %p55 = por %p53, %p54
      %p56 = scmp.ne.s32.totalorder %s48, %s51
      %p57 = scmp.eq.s32.totalorder %s12, 0
      %p58 = por %p56, %p57
      %p59 = scmp.ne.s32.totalorder %s48, %s51
      %p60 = scmp.eq.s32.totalorder %s17, 1
      %p61 = por %p59, %p60
      %p62 = scmp.ne.s32.totalorder %s51, %s52
      %p63 = scmp.eq.s32.totalorder %s17, 0
      %p64 = por %p62, %p63
      %p65 = scmp.ne.s32.totalorder %s51, %s52
      %p66 = scmp.eq.s32.totalorder %s18, 1
      %p67 = por %p65, %p66
      %p69 = scmp.ne.s32.totalorder %s52, %s68
      %p70 = scmp.eq.s32.totalorder %s18, 0
      %p71 = por %p69, %p70
      %s73 = sadd.s32 %s72, 1
      %p76 = scmp.eq.s32.totalorder %s12, 1
      %p77 = scmp.ne.s32.totalorder %s72, %s74
      %p78 = scmp.eq.s32.totalorder %s12, 0
      %p79 = por %p77, %p78
      %p80 = scmp.ne.s32.totalorder %s72, %s74
      %p81 = scmp.eq.s32.totalorder %s17, 1
      %p82 = por %p80, %p81
      %p83 = scmp.ne.s32.totalorder %s74, %s75
      %p84 = scmp.eq.s32.totalorder %s17, 0
      %p85 = por %p83, %p84
      %p86 = scmp.ne.s32.totalorder %s74, %s75
      %p87 = scmp.eq.s32.totalorder %s18, 1
      %p88 = por %p86, %p87
      %p90 = scmp.ne.s32.totalorder %s75, %s89
      %p91 = scmp.eq.s32.totalorder %s18, 0
      %p92 = por %p90, %p91
      %s93 = ssub.s32 %s12, %s19
      %p94 = scmp.eq.s32.totalorder %s93, 0
      %s96 = sadd.s32 %s95, 1
      %s97 = scalar_select %p94, %s95, %s96
      %p100 = pneg %p94
      %p101 = scmp.eq.s32.totalorder %s12, 1
      %p102 = por %p100, %p101
      %p103 = scmp.ne.s32.totalorder %s95, %s98
      %p104 = scmp.eq.s32.totalorder %s12, 0
      %p105 = por %p103, %p104
      %p106 = scmp.ne.s32.totalorder %s95, %s98
      %p107 = scmp.eq.s32.totalorder %s17, 1
      %p108 = por %p106, %p107
      %p109 = scmp.ne.s32.totalorder %s98, %s99
      %p110 = scmp.eq.s32.totalorder %s17, 0
      %p111 = por %p109, %p110
      %p112 = scmp.ne.s32.totalorder %s98, %s99
      %p113 = scmp.eq.s32.totalorder %s18, 1
      %p114 = por %p112, %p113
      %p116 = scmp.ne.s32.totalorder %s99, %s115
      %p117 = scmp.eq.s32.totalorder %s18, 0
      %p118 = por %p116, %p117
      %p119 = scmp.le.s32.totalorder 1, %s12
      %p120 = scmp.lt.s32.totalorder %s12, 3
      %p121 = pnand %p119, %p120
      %p122 = pneg %p121
      // Predicated region
      $region9: #{tpu_custom_call.1} parent=5 // pred_check
        _
      $region10: #{tpu_custom_call.1} parent=5 // pred_check_branch
        %124 = sbr.rel (%p121) target = $region12
      $region11: #{tpu_custom_call.1} parent=5 // pred_region
        %s125 = ssub.s32 %s12, 1
        // Predicated region
        $region13: #{tpu_custom_call.1} parent=11 // pred_check
          %p126 = pneg %p85
        $region14: #{tpu_custom_call.1} parent=11 // pred_check_branch
          %128 = sbr.rel (%p126) target = $region16
        $region15: #{tpu_custom_call.1} parent=11 // pred_region
          _
        $region16: #{tpu_custom_call.1} parent=11 // pred_fallthru
          _
      $region12: #{tpu_custom_call.1} parent=5 // pred_fallthru
        _
      %p129 = scmp.lt.s32.totalorder %s12, 2
      // Predicated region
      $region17: #{tpu_custom_call.1} parent=5 // pred_check
        %p130 = pneg %p129
      $region18: #{tpu_custom_call.1} parent=5 // pred_check_branch
        %132 = sbr.rel (%p130) target = $region20
      $region19: #{tpu_custom_call.1} parent=5 // pred_region
        // Predicated region
        $region21: #{tpu_custom_call.1} parent=19 // pred_check
          %p133 = pneg %p32
        $region22: #{tpu_custom_call.1} parent=19 // pred_check_branch
          %135 = sbr.rel (%p133) target = $region24
        $region23: #{tpu_custom_call.1} parent=19 // pred_region
          %p136 = scmp.lt.s32.totalorder %s12, 1
          %s137 = scalar_select %p136, %s12, 1
          %s138 = smul.addr %s137, 8
          %s139 = scalar_lea.vmem %s0, %s138
        $region24: #{tpu_custom_call.1} parent=19 // pred_fallthru
          _
        // Predicated region
        $region25: #{tpu_custom_call.1} parent=19 // pred_check
          %p140 = pneg %p58
        $region26: #{tpu_custom_call.1} parent=19 // pred_check_branch
          %142 = sbr.rel (%p140) target = $region28
        $region27: #{tpu_custom_call.1} parent=19 // pred_region
          %p143 = scmp.lt.s32.totalorder %s12, 1
          %s144 = scalar_select %p143, %s12, 1
          %s145 = smul.addr %s144, 8
          %s146 = scalar_lea.vmem %s1, %s145
        $region28: #{tpu_custom_call.1} parent=19 // pred_fallthru
          _
      $region20: #{tpu_custom_call.1} parent=5 // pred_fallthru
        _
      %p147 = scmp.le.s32.totalorder 1, %s12
      %p148 = scmp.lt.s32.totalorder %s12, 3
      %p149 = pnand %p147, %p148
      %p150 = pneg %p149
      // Predicated region
      $region29: #{tpu_custom_call.1} parent=5 // pred_check
        _
      $region30: #{tpu_custom_call.1} parent=5 // pred_check_branch
        %152 = sbr.rel (%p149) target = $region32
      $region31: #{tpu_custom_call.1} parent=5 // pred_region
        %s153 = ssub.s32 %s12, 1
        %p154 = scmp.lt.s32.totalorder %s17, 1
        %s155 = scalar_select %p154, %s17, 1
        %s156 = smul.addr %s155, 8
        %s157 = scalar_lea.vmem %s0, %s156
        %p158 = pneg %p38
        %p159 = pneg %p35
        %p160 = scmp.lt.s32.totalorder %s17, 1
        %s161 = scalar_select %p160, %s17, 1
        %s162 = smul.addr %s161, 8
        %s163 = scalar_lea.vmem %s1, %s162
        %p164 = pneg %p64
        %p165 = pneg %p61
        %p166 = pneg %p85
        %p167 = pneg %p82
        %p168 = pneg %p111
        %p169 = pneg %p108
        %s170 = sand.u32 %s98, 1
        %s171 = scalar_lea.sflag [#allocation3], %s170
        %s172 = sand.u32 %s98, 1
        %s173 = smul.addr %s172, 8
        %s174 = scalar_lea.vmem [#allocation2], %s173
        %p175 = scmp.lt.s32.totalorder %s17, 1
        %s176 = scalar_select %p175, %s17, 1
        %s177 = smul.addr %s176, 8
        %s178 = scalar_lea.vmem %s0, %s177
        %p179 = scmp.lt.s32.totalorder %s17, 1
        %s180 = scalar_select %p179, %s17, 1
        %s181 = smul.addr %s180, 8
        %s182 = scalar_lea.vmem %s1, %s181
        %v183 = vld [vmem:[%s178] sm:$0xff]
        %v184 = vld [vmem:[%s182] sm:$0xff]
        %v185 = vld [vmem:[%s2] sm:$0xff]
        %v186 = vld [vmem:[%s2 + $0x8] sm:$0xff]
        %v187 = vld [vmem:[%s2 + $0x10] sm:$0xff]
        %v188 = vld [vmem:[%s2 + $0xd8] sm:$0x1]
        %v189 = vlaneseq
        %v190 = vshrl.u32 %v189, 7
        %v191 = vsub.s32 0, %v190
        %v192 = vrot.slane %v188, %v191
        %vm193 = vcmask 195584
        %v195 = vsel %vm193, %v184, 0
        %197 = vmatprep.subr.mxu0 0.0
        %198 = vmatpush1.msra.mxu0 %v185
        %199 = vmatprep.subr.mxu0 0.0
        %200 = vmatpush1.msra.mxu0 %v186
        %201 = vmatprep.subr.mxu0 0.0
        %202 = vmatpush1.msra.mxu0 %v187
        %203 = vmatprep.subr.mxu0 0.0
        %204 = vmatpush1.msra.mxu0 0.0
        %205 = vmatprep.subr.mxu0 0.0
        %206 = vmatpush1.msra.mxu0 0.0
        %207 = vmatprep.subr.mxu0 0.0
        %208 = vmatpush1.msra.mxu0 0.0
        %209 = vmatprep.subr.mxu0 0.0
        %210 = vmatpush1.msra.mxu0 0.0
        %211 = vmatprep.subr.mxu0 0.0
        %212 = vmatpush1.msra.mxu0 0.0
        %213 = vmatprep.subr.mxu0 0.0
        %214 = vmatpush1.msra.mxu0 0.0
        %215 = vmatprep.subr.mxu0 0.0
        %216 = vmatpush1.msra.mxu0 0.0
        %217 = vmatprep.subr.mxu0 0.0
        %218 = vmatpush1.msra.mxu0 0.0
        %219 = vmatprep.subr.mxu0 0.0
        %220 = vmatpush1.msra.mxu0 0.0
        %221 = vmatprep.subr.mxu0 0.0
        %222 = vmatpush1.msra.mxu0 0.0
        %223 = vmatprep.subr.mxu0 0.0
        %224 = vmatpush1.msra.mxu0 0.0
        %225 = vmatprep.subr.mxu0 0.0
        %226 = vmatpush1.msra.mxu0 0.0
        %227 = vmatprep.subr.mxu0 0.0
        %228 = vmatpush1.msra.mxu0 0.0
        %229 = vmatprep.subr.mxu0 0.0
        %230 = vmatpush1.msra.mxu0 0.0
        %231 = vmatprep.subr.mxu0 0.0
        %232 = vmatpush1.msra.mxu0 0.0
        %233 = vmatprep.subr.mxu0 0.0
        %234 = vmatpush1.msra.mxu0 0.0
        %235 = vmatprep.subr.mxu0 0.0
        %236 = vmatpush1.msra.mxu0 0.0
        %237 = vmatprep.subr.mxu0 0.0
        %238 = vmatpush1.msra.mxu0 0.0
        %239 = vmatprep.subr.mxu0 0.0
        %240 = vmatpush1.msra.mxu0 0.0
        %241 = vmatprep.subr.mxu0 0.0
        %242 = vmatpush1.msra.mxu0 0.0
        %243 = vmatprep.subr.mxu0 0.0
        %244 = vmatpush1.msra.mxu0 0.0
        %245 = vmatprep.subr.mxu0 0.0
        %246 = vmatpush1.msra.mxu0 0.0
        %247 = vmatprep.subr.mxu0 0.0
        %248 = vmatpush1.msra.mxu0 0.0
        %249 = vmatprep.subr.mxu0 0.0
        %250 = vmatpush1.msra.mxu0 0.0
        %251 = vmatprep.subr.mxu0 0.0
        %252 = vmatpush1.msra.mxu0 0.0
        %253 = vmatprep.subr.mxu0 0.0
        %254 = vmatpush1.msra.mxu0 0.0
        %255 = vmatprep.subr.mxu0 0.0
        %256 = vmatpush1.msra.mxu0 0.0
        %257 = vmatprep.subr.mxu0 0.0
        %258 = vmatpush1.msra.mxu0 0.0
        %259 = vmatprep.subr.mxu0 0.0
        %260 = vmatpush1.msra.mxu0 0.0
        %261 = vmatprep.mubr.f32.mxu0 0.0
        %262 = vmatmul.mubr.f32.gmra.mrb[0].mxu0 %v195
        %v263 = vpop.f32.mrb[0].mxu0
        %v264 = vadd.f32 %v192, %v263
        %v265 = vpop.f32.mrb[0].mxu0
        %266 = vdwg.mxu0
        %v267 = vld [vmem:[%s2 + $0x38] sm:$0xff]
        %v268 = vld [vmem:[%s2 + $0x40] sm:$0xff]
        %v269 = vld [vmem:[%s2 + $0x48] sm:$0xff]
        %v270 = vld [vmem:[%s2 + $0x50] sm:$0xff]
        %v271 = vld [vmem:[%s2 + $0xdb] sm:$0x1]
        %v272 = vlaneseq
        %v273 = vshrl.u32 %v272, 7
        %v274 = vsub.s32 0, %v273
        %v275 = vrot.slane %v271, %v274
        %vm276 = vcmask 261120
        %v278 = vsel %vm276, %v264, 0
        %280 = vmatprep.subr.mxu0 0.0
        %281 = vmatpush1.msra.mxu0 %v267
        %282 = vmatprep.subr.mxu0 0.0
        %283 = vmatpush1.msra.mxu0 %v268
        %284 = vmatprep.subr.mxu0 0.0
        %285 = vmatpush1.msra.mxu0 %v269
        %286 = vmatprep.subr.mxu0 0.0
        %287 = vmatpush1.msra.mxu0 %v270
        %288 = vmatprep.subr.mxu0 0.0
        %289 = vmatpush1.msra.mxu0 0.0
        %290 = vmatprep.subr.mxu0 0.0
        %291 = vmatpush1.msra.mxu0 0.0
        %292 = vmatprep.subr.mxu0 0.0
        %293 = vmatpush1.msra.mxu0 0.0
        %294 = vmatprep.subr.mxu0 0.0
        %295 = vmatpush1.msra.mxu0 0.0
        %296 = vmatprep.subr.mxu0 0.0
        %297 = vmatpush1.msra.mxu0 0.0
        %298 = vmatprep.subr.mxu0 0.0
        %299 = vmatpush1.msra.mxu0 0.0
        %300 = vmatprep.subr.mxu0 0.0
        %301 = vmatpush1.msra.mxu0 0.0
        %302 = vmatprep.subr.mxu0 0.0
        %303 = vmatpush1.msra.mxu0 0.0
        %304 = vmatprep.subr.mxu0 0.0
        %305 = vmatpush1.msra.mxu0 0.0
        %306 = vmatprep.subr.mxu0 0.0
        %307 = vmatpush1.msra.mxu0 0.0
        %308 = vmatprep.subr.mxu0 0.0
        %309 = vmatpush1.msra.mxu0 0.0
        %310 = vmatprep.subr.mxu0 0.0
        %311 = vmatpush1.msra.mxu0 0.0
        %312 = vmatprep.subr.mxu0 0.0
        %313 = vmatpush1.msra.mxu0 0.0
        %314 = vmatprep.subr.mxu0 0.0
        %315 = vmatpush1.msra.mxu0 0.0
        %316 = vmatprep.subr.mxu0 0.0
        %317 = vmatpush1.msra.mxu0 0.0
        %318 = vmatprep.subr.mxu0 0.0
        %319 = vmatpush1.msra.mxu0 0.0
        %320 = vmatprep.subr.mxu0 0.0
        %321 = vmatpush1.msra.mxu0 0.0
        %322 = vmatprep.subr.mxu0 0.0
        %323 = vmatpush1.msra.mxu0 0.0
        %324 = vmatprep.subr.mxu0 0.0
        %325 = vmatpush1.msra.mxu0 0.0
        %326 = vmatprep.subr.mxu0 0.0
        %327 = vmatpush1.msra.mxu0 0.0
        %328 = vmatprep.subr.mxu0 0.0
        %329 = vmatpush1.msra.mxu0 0.0
        %330 = vmatprep.subr.mxu0 0.0
        %331 = vmatpush1.msra.mxu0 0.0
        %332 = vmatprep.subr.mxu0 0.0
        %333 = vmatpush1.msra.mxu0 0.0
        %334 = vmatprep.subr.mxu0 0.0
        %335 = vmatpush1.msra.mxu0 0.0
        %336 = vmatprep.subr.mxu0 0.0
        %337 = vmatpush1.msra.mxu0 0.0
        %338 = vmatprep.subr.mxu0 0.0
        %339 = vmatpush1.msra.mxu0 0.0
        %340 = vmatprep.subr.mxu0 0.0
        %341 = vmatpush1.msra.mxu0 0.0
        %342 = vmatprep.subr.mxu0 0.0
        %343 = vmatpush1.msra.mxu0 0.0
        %344 = vmatprep.mubr.f32.mxu0 0.0
        %345 = vmatmul.mubr.f32.gmra.mrb[0].mxu0 %v278
        %v346 = vpop.f32.mrb[0].mxu0
        %v347 = vadd.f32 %v275, %v346
        %v348 = vpop.f32.mrb[0].mxu0
        %349 = vdwg.mxu0
        %v350 = vld [vmem:[%s2 + $0x18] sm:$0xff]
        %v351 = vld [vmem:[%s2 + $0x20] sm:$0xff]
        %v352 = vld [vmem:[%s2 + $0xd9] sm:$0x1]
        %v353 = vlaneseq
        %v354 = vshrl.u32 %v353, 7
        %v355 = vsub.s32 0, %v354
        %v356 = vrot.slane %v352, %v355
        %vm357 = vcmask 130048
        %v359 = vsel %vm357, %v183, 0
        %361 = vmatprep.subr.mxu0 0.0
        %362 = vmatpush1.msra.mxu0 %v350
        %363 = vmatprep.subr.mxu0 0.0
        %364 = vmatpush1.msra.mxu0 %v351
        %365 = vmatprep.subr.mxu0 0.0
        %366 = vmatpush1.msra.mxu0 0.0
        %367 = vmatprep.subr.mxu0 0.0
        %368 = vmatpush1.msra.mxu0 0.0
        %369 = vmatprep.subr.mxu0 0.0
        %370 = vmatpush1.msra.mxu0 0.0
        %371 = vmatprep.subr.mxu0 0.0
        %372 = vmatpush1.msra.mxu0 0.0
        %373 = vmatprep.subr.mxu0 0.0
        %374 = vmatpush1.msra.mxu0 0.0
        %375 = vmatprep.subr.mxu0 0.0
        %376 = vmatpush1.msra.mxu0 0.0
        %377 = vmatprep.subr.mxu0 0.0
        %378 = vmatpush1.msra.mxu0 0.0
        %379 = vmatprep.subr.mxu0 0.0
        %380 = vmatpush1.msra.mxu0 0.0
        %381 = vmatprep.subr.mxu0 0.0
        %382 = vmatpush1.msra.mxu0 0.0
        %383 = vmatprep.subr.mxu0 0.0
        %384 = vmatpush1.msra.mxu0 0.0
        %385 = vmatprep.subr.mxu0 0.0
        %386 = vmatpush1.msra.mxu0 0.0
        %387 = vmatprep.subr.mxu0 0.0
        %388 = vmatpush1.msra.mxu0 0.0
        %389 = vmatprep.subr.mxu0 0.0
        %390 = vmatpush1.msra.mxu0 0.0
        %391 = vmatprep.subr.mxu0 0.0
        %392 = vmatpush1.msra.mxu0 0.0
        %393 = vmatprep.subr.mxu0 0.0
        %394 = vmatpush1.msra.mxu0 0.0
        %395 = vmatprep.subr.mxu0 0.0
        %396 = vmatpush1.msra.mxu0 0.0
        %397 = vmatprep.subr.mxu0 0.0
        %398 = vmatpush1.msra.mxu0 0.0
        %399 = vmatprep.subr.mxu0 0.0
        %400 = vmatpush1.msra.mxu0 0.0
        %401 = vmatprep.subr.mxu0 0.0
        %402 = vmatpush1.msra.mxu0 0.0
        %403 = vmatprep.subr.mxu0 0.0
        %404 = vmatpush1.msra.mxu0 0.0
        %405 = vmatprep.subr.mxu0 0.0
        %406 = vmatpush1.msra.mxu0 0.0
        %407 = vmatprep.subr.mxu0 0.0
        %408 = vmatpush1.msra.mxu0 0.0
        %409 = vmatprep.subr.mxu0 0.0
        %410 = vmatpush1.msra.mxu0 0.0
        %411 = vmatprep.subr.mxu0 0.0
        %412 = vmatpush1.msra.mxu0 0.0
        %413 = vmatprep.subr.mxu0 0.0
        %414 = vmatpush1.msra.mxu0 0.0
        %415 = vmatprep.subr.mxu0 0.0
        %416 = vmatpush1.msra.mxu0 0.0
        %417 = vmatprep.subr.mxu0 0.0
        %418 = vmatpush1.msra.mxu0 0.0
        %419 = vmatprep.subr.mxu0 0.0
        %420 = vmatpush1.msra.mxu0 0.0
        %421 = vmatprep.subr.mxu0 0.0
        %422 = vmatpush1.msra.mxu0 0.0
        %423 = vmatprep.subr.mxu0 0.0
        %424 = vmatpush1.msra.mxu0 0.0
        %425 = vmatprep.mubr.f32.mxu0 0.0
        %426 = vmatmul.mubr.f32.gmra.mrb[0].mxu0 %v359
        %v427 = vpop.f32.mrb[0].mxu0
        %v428 = vadd.f32 %v356, %v427
        %v429 = vpop.f32.mrb[0].mxu0
        %430 = vdwg.mxu0
        %v431 = vld [vmem:[%s2 + $0x28] sm:$0xff]
        %v432 = vld [vmem:[%s2 + $0x30] sm:$0xff]
        %v433 = vld [vmem:[%s2 + $0xda] sm:$0x1]
        %v434 = vlaneseq
        %v435 = vshrl.u32 %v434, 7
        %v436 = vsub.s32 0, %v435
        %v437 = vrot.slane %v433, %v436
        %438 = vmatprep.subr.mxu0 0.0
        %439 = vmatpush1.msra.mxu0 %v431
        %440 = vmatprep.subr.mxu0 0.0
        %441 = vmatpush1.msra.mxu0 %v432
        %442 = vmatprep.subr.mxu0 0.0
        %443 = vmatpush1.msra.mxu0 0.0
        %444 = vmatprep.subr.mxu0 0.0
        %445 = vmatpush1.msra.mxu0 0.0
        %446 = vmatprep.subr.mxu0 0.0
        %447 = vmatpush1.msra.mxu0 0.0
        %448 = vmatprep.subr.mxu0 0.0
        %449 = vmatpush1.msra.mxu0 0.0
        %450 = vmatprep.subr.mxu0 0.0
        %451 = vmatpush1.msra.mxu0 0.0
        %452 = vmatprep.subr.mxu0 0.0
        %453 = vmatpush1.msra.mxu0 0.0
        %454 = vmatprep.subr.mxu0 0.0
        %455 = vmatpush1.msra.mxu0 0.0
        %456 = vmatprep.subr.mxu0 0.0
        %457 = vmatpush1.msra.mxu0 0.0
        %458 = vmatprep.subr.mxu0 0.0
        %459 = vmatpush1.msra.mxu0 0.0
        %460 = vmatprep.subr.mxu0 0.0
        %461 = vmatpush1.msra.mxu0 0.0
        %462 = vmatprep.subr.mxu0 0.0
        %463 = vmatpush1.msra.mxu0 0.0
        %464 = vmatprep.subr.mxu0 0.0
        %465 = vmatpush1.msra.mxu0 0.0
        %466 = vmatprep.subr.mxu0 0.0
        %467 = vmatpush1.msra.mxu0 0.0
        %468 = vmatprep.subr.mxu0 0.0
        %469 = vmatpush1.msra.mxu0 0.0
        %470 = vmatprep.subr.mxu0 0.0
        %471 = vmatpush1.msra.mxu0 0.0
        %472 = vmatprep.subr.mxu0 0.0
        %473 = vmatpush1.msra.mxu0 0.0
        %474 = vmatprep.subr.mxu0 0.0
        %475 = vmatpush1.msra.mxu0 0.0
        %476 = vmatprep.subr.mxu0 0.0
        %477 = vmatpush1.msra.mxu0 0.0
        %478 = vmatprep.subr.mxu0 0.0
        %479 = vmatpush1.msra.mxu0 0.0
        %480 = vmatprep.subr.mxu0 0.0
        %481 = vmatpush1.msra.mxu0 0.0
        %482 = vmatprep.subr.mxu0 0.0
        %483 = vmatpush1.msra.mxu0 0.0
        %484 = vmatprep.subr.mxu0 0.0
        %485 = vmatpush1.msra.mxu0 0.0
        %486 = vmatprep.subr.mxu0 0.0
        %487 = vmatpush1.msra.mxu0 0.0
        %488 = vmatprep.subr.mxu0 0.0
        %489 = vmatpush1.msra.mxu0 0.0
        %490 = vmatprep.subr.mxu0 0.0
        %491 = vmatpush1.msra.mxu0 0.0
        %492 = vmatprep.subr.mxu0 0.0
        %493 = vmatpush1.msra.mxu0 0.0
        %494 = vmatprep.subr.mxu0 0.0
        %495 = vmatpush1.msra.mxu0 0.0
        %496 = vmatprep.subr.mxu0 0.0
        %497 = vmatpush1.msra.mxu0 0.0
        %498 = vmatprep.subr.mxu0 0.0
        %499 = vmatpush1.msra.mxu0 0.0
        %500 = vmatprep.subr.mxu0 0.0
        %501 = vmatpush1.msra.mxu0 0.0
        %502 = vmatprep.mubr.f32.mxu0 0.0
        %503 = vmatmul.mubr.f32.gmra.mrb[0].mxu0 %v359
        %v504 = vpop.f32.mrb[0].mxu0
        %v505 = vadd.f32 %v437, %v504
        %v506 = vpop.f32.mrb[0].mxu0
        %507 = vdwg.mxu0
        %509 = vrot.lane.b32.xlu0 %v347, 120
        %v510 = vpop.permute.xlu0 %509
        %511 = vrot.lane.b32.xlu0 %v347, 112
        %v512 = vpop.permute.xlu0 %511
        %513 = vrot.lane.b32.xlu0 %v347, 104
        %v514 = vpop.permute.xlu0 %513
        %516 = vrot.lane.b32.xlu0 %v428, 120
        %v517 = vpop.permute.xlu0 %516
        %518 = vrot.lane.b32.xlu0 %v428, 112
        %v519 = vpop.permute.xlu0 %518
        %520 = vrot.lane.b32.xlu0 %v428, 104
        %v521 = vpop.permute.xlu0 %520
        %523 = vrot.lane.b32.xlu0 %v505, 120
        %v524 = vpop.permute.xlu0 %523
        %526 = vrot.lane.b32.xlu0 %v505, 112
        %v527 = vpop.permute.xlu0 %526
        %529 = vrot.lane.b32.xlu0 %v505, 104
        %v530 = vpop.permute.xlu0 %529
        %vm532 = vcmask 64512
        %v533 = vsel %vm532, %v347, 0
        %v535 = vsel %vm532, %v428, 0
        %537 = vmatprep.subr.mxu0 0.0
        %538 = vmatpush1.xpose.msra.mxu0 %v535
        %539 = vmatprep.subr.mxu0 0.0
        %540 = vmatpush1.xpose.msra.mxu0 0.0
        %541 = vmatprep.subr.mxu0 0.0
        %542 = vmatpush1.xpose.msra.mxu0 0.0
        %543 = vmatprep.subr.mxu0 0.0
        %544 = vmatpush1.xpose.msra.mxu0 0.0
        %545 = vmatprep.subr.mxu0 0.0
        %546 = vmatpush1.xpose.msra.mxu0 0.0
        %547 = vmatprep.subr.mxu0 0.0
        %548 = vmatpush1.xpose.msra.mxu0 0.0
        %549 = vmatprep.subr.mxu0 0.0
        %550 = vmatpush1.xpose.msra.mxu0 0.0
        %551 = vmatprep.subr.mxu0 0.0
        %552 = vmatpush1.xpose.msra.mxu0 0.0
        %553 = vmatprep.subr.mxu0 0.0
        %554 = vmatpush1.xpose.msra.mxu0 0.0
        %555 = vmatprep.subr.mxu0 0.0
        %556 = vmatpush1.xpose.msra.mxu0 0.0
        %557 = vmatprep.subr.mxu0 0.0
        %558 = vmatpush1.xpose.msra.mxu0 0.0
        %559 = vmatprep.subr.mxu0 0.0
        %560 = vmatpush1.xpose.msra.mxu0 0.0
        %561 = vmatprep.subr.mxu0 0.0
        %562 = vmatpush1.xpose.msra.mxu0 0.0
        %563 = vmatprep.subr.mxu0 0.0
        %564 = vmatpush1.xpose.msra.mxu0 0.0
        %565 = vmatprep.subr.mxu0 0.0
        %566 = vmatpush1.xpose.msra.mxu0 0.0
        %567 = vmatprep.subr.mxu0 0.0
        %568 = vmatpush1.xpose.msra.mxu0 0.0
        %569 = vmatprep.subr.mxu0 0.0
        %570 = vmatpush1.xpose.msra.mxu0 0.0
        %571 = vmatprep.subr.mxu0 0.0
        %572 = vmatpush1.xpose.msra.mxu0 0.0
        %573 = vmatprep.subr.mxu0 0.0
        %574 = vmatpush1.xpose.msra.mxu0 0.0
        %575 = vmatprep.subr.mxu0 0.0
        %576 = vmatpush1.xpose.msra.mxu0 0.0
        %577 = vmatprep.subr.mxu0 0.0
        %578 = vmatpush1.xpose.msra.mxu0 0.0
        %579 = vmatprep.subr.mxu0 0.0
        %580 = vmatpush1.xpose.msra.mxu0 0.0
        %581 = vmatprep.subr.mxu0 0.0
        %582 = vmatpush1.xpose.msra.mxu0 0.0
        %583 = vmatprep.subr.mxu0 0.0
        %584 = vmatpush1.xpose.msra.mxu0 0.0
        %585 = vmatprep.subr.mxu0 0.0
        %586 = vmatpush1.xpose.msra.mxu0 0.0
        %587 = vmatprep.subr.mxu0 0.0
        %588 = vmatpush1.xpose.msra.mxu0 0.0
        %589 = vmatprep.subr.mxu0 0.0
        %590 = vmatpush1.xpose.msra.mxu0 0.0
        %591 = vmatprep.subr.mxu0 0.0
        %592 = vmatpush1.xpose.msra.mxu0 0.0
        %593 = vmatprep.subr.mxu0 0.0
        %594 = vmatpush1.xpose.msra.mxu0 0.0
        %595 = vmatprep.subr.mxu0 0.0
        %596 = vmatpush1.xpose.msra.mxu0 0.0
        %597 = vmatprep.subr.mxu0 0.0
        %598 = vmatpush1.xpose.msra.mxu0 0.0
        %599 = vmatprep.subr.mxu0 0.0
        %600 = vmatpush1.xpose.msra.mxu0 0.0
        %601 = vmatprep.mubr.f32.mxu0 0.0
        %602 = vmatmul.mubr.f32.gmra.mrb[0].mxu0 %v533
        %v603 = vpop.f32.mrb[0].mxu0
        %v604 = vadd.f32 0.0, %v603
        %v605 = vpop.f32.mrb[0].mxu0
        %606 = vdwg.mxu0
        %v607 = vsel %vm532, %v510, 0
        %v609 = vsel %vm532, %v517, 0
        %611 = vmatprep.subr.mxu0 0.0
        %612 = vmatpush1.xpose.msra.mxu0 %v609
        %613 = vmatprep.subr.mxu0 0.0
        %614 = vmatpush1.xpose.msra.mxu0 0.0
        %615 = vmatprep.subr.mxu0 0.0
        %616 = vmatpush1.xpose.msra.mxu0 0.0
        %617 = vmatprep.subr.mxu0 0.0
        %618 = vmatpush1.xpose.msra.mxu0 0.0
        %619 = vmatprep.subr.mxu0 0.0
        %620 = vmatpush1.xpose.msra.mxu0 0.0
        %621 = vmatprep.subr.mxu0 0.0
        %622 = vmatpush1.xpose.msra.mxu0 0.0
        %623 = vmatprep.subr.mxu0 0.0
        %624 = vmatpush1.xpose.msra.mxu0 0.0
        %625 = vmatprep.subr.mxu0 0.0
        %626 = vmatpush1.xpose.msra.mxu0 0.0
        %627 = vmatprep.subr.mxu0 0.0
        %628 = vmatpush1.xpose.msra.mxu0 0.0
        %629 = vmatprep.subr.mxu0 0.0
        %630 = vmatpush1.xpose.msra.mxu0 0.0
        %631 = vmatprep.subr.mxu0 0.0
        %632 = vmatpush1.xpose.msra.mxu0 0.0
        %633 = vmatprep.subr.mxu0 0.0
        %634 = vmatpush1.xpose.msra.mxu0 0.0
        %635 = vmatprep.subr.mxu0 0.0
        %636 = vmatpush1.xpose.msra.mxu0 0.0
        %637 = vmatprep.subr.mxu0 0.0
        %638 = vmatpush1.xpose.msra.mxu0 0.0
        %639 = vmatprep.subr.mxu0 0.0
        %640 = vmatpush1.xpose.msra.mxu0 0.0
        %641 = vmatprep.subr.mxu0 0.0
        %642 = vmatpush1.xpose.msra.mxu0 0.0
        %643 = vmatprep.subr.mxu0 0.0
        %644 = vmatpush1.xpose.msra.mxu0 0.0
        %645 = vmatprep.subr.mxu0 0.0
        %646 = vmatpush1.xpose.msra.mxu0 0.0
        %647 = vmatprep.subr.mxu0 0.0
        %648 = vmatpush1.xpose.msra.mxu0 0.0
        %649 = vmatprep.subr.mxu0 0.0
        %650 = vmatpush1.xpose.msra.mxu0 0.0
        %651 = vmatprep.subr.mxu0 0.0
        %652 = vmatpush1.xpose.msra.mxu0 0.0
        %653 = vmatprep.subr.mxu0 0.0
        %654 = vmatpush1.xpose.msra.mxu0 0.0
        %655 = vmatprep.subr.mxu0 0.0
        %656 = vmatpush1.xpose.msra.mxu0 0.0
        %657 = vmatprep.subr.mxu0 0.0
        %658 = vmatpush1.xpose.msra.mxu0 0.0
        %659 = vmatprep.subr.mxu0 0.0
        %660 = vmatpush1.xpose.msra.mxu0 0.0
        %661 = vmatprep.subr.mxu0 0.0
        %662 = vmatpush1.xpose.msra.mxu0 0.0
        %663 = vmatprep.subr.mxu0 0.0
        %664 = vmatpush1.xpose.msra.mxu0 0.0
        %665 = vmatprep.subr.mxu0 0.0
        %666 = vmatpush1.xpose.msra.mxu0 0.0
        %667 = vmatprep.subr.mxu0 0.0
        %668 = vmatpush1.xpose.msra.mxu0 0.0
        %669 = vmatprep.subr.mxu0 0.0
        %670 = vmatpush1.xpose.msra.mxu0 0.0
        %671 = vmatprep.subr.mxu0 0.0
        %672 = vmatpush1.xpose.msra.mxu0 0.0
        %673 = vmatprep.subr.mxu0 0.0
        %674 = vmatpush1.xpose.msra.mxu0 0.0
        %675 = vmatprep.mubr.f32.mxu0 0.0
        %676 = vmatmul.mubr.f32.gmra.mrb[0].mxu0 %v607
        %v677 = vpop.f32.mrb[0].mxu0
        %v678 = vadd.f32 0.0, %v677
        %v679 = vpop.f32.mrb[0].mxu0
        %680 = vdwg.mxu0
        %v681 = vsel %vm532, %v512, 0
        %v683 = vsel %vm532, %v519, 0
        %685 = vmatprep.subr.mxu0 0.0
        %686 = vmatpush1.xpose.msra.mxu0 %v683
        %687 = vmatprep.subr.mxu0 0.0
        %688 = vmatpush1.xpose.msra.mxu0 0.0
        %689 = vmatprep.subr.mxu0 0.0
        %690 = vmatpush1.xpose.msra.mxu0 0.0
        %691 = vmatprep.subr.mxu0 0.0
        %692 = vmatpush1.xpose.msra.mxu0 0.0
        %693 = vmatprep.subr.mxu0 0.0
        %694 = vmatpush1.xpose.msra.mxu0 0.0
        %695 = vmatprep.subr.mxu0 0.0
        %696 = vmatpush1.xpose.msra.mxu0 0.0
        %697 = vmatprep.subr.mxu0 0.0
        %698 = vmatpush1.xpose.msra.mxu0 0.0
        %699 = vmatprep.subr.mxu0 0.0
        %700 = vmatpush1.xpose.msra.mxu0 0.0
        %701 = vmatprep.subr.mxu0 0.0
        %702 = vmatpush1.xpose.msra.mxu0 0.0
        %703 = vmatprep.subr.mxu0 0.0
        %704 = vmatpush1.xpose.msra.mxu0 0.0
        %705 = vmatprep.subr.mxu0 0.0
        %706 = vmatpush1.xpose.msra.mxu0 0.0
        %707 = vmatprep.subr.mxu0 0.0
        %708 = vmatpush1.xpose.msra.mxu0 0.0
        %709 = vmatprep.subr.mxu0 0.0
        %710 = vmatpush1.xpose.msra.mxu0 0.0
        %711 = vmatprep.subr.mxu0 0.0
        %712 = vmatpush1.xpose.msra.mxu0 0.0
        %713 = vmatprep.subr.mxu0 0.0
        %714 = vmatpush1.xpose.msra.mxu0 0.0
        %715 = vmatprep.subr.mxu0 0.0
        %716 = vmatpush1.xpose.msra.mxu0 0.0
        %717 = vmatprep.subr.mxu0 0.0
        %718 = vmatpush1.xpose.msra.mxu0 0.0
        %719 = vmatprep.subr.mxu0 0.0
        %720 = vmatpush1.xpose.msra.mxu0 0.0
        %721 = vmatprep.subr.mxu0 0.0
        %722 = vmatpush1.xpose.msra.mxu0 0.0
        %723 = vmatprep.subr.mxu0 0.0
        %724 = vmatpush1.xpose.msra.mxu0 0.0
        %725 = vmatprep.subr.mxu0 0.0
        %726 = vmatpush1.xpose.msra.mxu0 0.0
        %727 = vmatprep.subr.mxu0 0.0
        %728 = vmatpush1.xpose.msra.mxu0 0.0
        %729 = vmatprep.subr.mxu0 0.0
        %730 = vmatpush1.xpose.msra.mxu0 0.0
        %731 = vmatprep.subr.mxu0 0.0
        %732 = vmatpush1.xpose.msra.mxu0 0.0
        %733 = vmatprep.subr.mxu0 0.0
        %734 = vmatpush1.xpose.msra.mxu0 0.0
        %735 = vmatprep.subr.mxu0 0.0
        %736 = vmatpush1.xpose.msra.mxu0 0.0
        %737 = vmatprep.subr.mxu0 0.0
        %738 = vmatpush1.xpose.msra.mxu0 0.0
        %739 = vmatprep.subr.mxu0 0.0
        %740 = vmatpush1.xpose.msra.mxu0 0.0
        %741 = vmatprep.subr.mxu0 0.0
        %742 = vmatpush1.xpose.msra.mxu0 0.0
        %743 = vmatprep.subr.mxu0 0.0
        %744 = vmatpush1.xpose.msra.mxu0 0.0
        %745 = vmatprep.subr.mxu0 0.0
        %746 = vmatpush1.xpose.msra.mxu0 0.0
        %747 = vmatprep.subr.mxu0 0.0
        %748 = vmatpush1.xpose.msra.mxu0 0.0
        %749 = vmatprep.mubr.f32.mxu0 0.0
        %750 = vmatmul.mubr.f32.gmra.mrb[0].mxu0 %v681
        %v751 = vpop.f32.mrb[0].mxu0
        %v752 = vadd.f32 0.0, %v751
        %v753 = vpop.f32.mrb[0].mxu0
        %754 = vdwg.mxu0
        %v755 = vsel %vm532, %v514, 0
        %v757 = vsel %vm532, %v521, 0
        %759 = vmatprep.subr.mxu0 0.0
        %760 = vmatpush1.xpose.msra.mxu0 %v757
        %761 = vmatprep.subr.mxu0 0.0
        %762 = vmatpush1.xpose.msra.mxu0 0.0
        %763 = vmatprep.subr.mxu0 0.0
        %764 = vmatpush1.xpose.msra.mxu0 0.0
        %765 = vmatprep.subr.mxu0 0.0
        %766 = vmatpush1.xpose.msra.mxu0 0.0
        %767 = vmatprep.subr.mxu0 0.0
        %768 = vmatpush1.xpose.msra.mxu0 0.0
        %769 = vmatprep.subr.mxu0 0.0
        %770 = vmatpush1.xpose.msra.mxu0 0.0
        %771 = vmatprep.subr.mxu0 0.0
        %772 = vmatpush1.xpose.msra.mxu0 0.0
        %773 = vmatprep.subr.mxu0 0.0
        %774 = vmatpush1.xpose.msra.mxu0 0.0
        %775 = vmatprep.subr.mxu0 0.0
        %776 = vmatpush1.xpose.msra.mxu0 0.0
        %777 = vmatprep.subr.mxu0 0.0
        %778 = vmatpush1.xpose.msra.mxu0 0.0
        %779 = vmatprep.subr.mxu0 0.0
        %780 = vmatpush1.xpose.msra.mxu0 0.0
        %781 = vmatprep.subr.mxu0 0.0
        %782 = vmatpush1.xpose.msra.mxu0 0.0
        %783 = vmatprep.subr.mxu0 0.0
        %784 = vmatpush1.xpose.msra.mxu0 0.0
        %785 = vmatprep.subr.mxu0 0.0
        %786 = vmatpush1.xpose.msra.mxu0 0.0
        %787 = vmatprep.subr.mxu0 0.0
        %788 = vmatpush1.xpose.msra.mxu0 0.0
        %789 = vmatprep.subr.mxu0 0.0
        %790 = vmatpush1.xpose.msra.mxu0 0.0
        %791 = vmatprep.subr.mxu0 0.0
        %792 = vmatpush1.xpose.msra.mxu0 0.0
        %793 = vmatprep.subr.mxu0 0.0
        %794 = vmatpush1.xpose.msra.mxu0 0.0
        %795 = vmatprep.subr.mxu0 0.0
        %796 = vmatpush1.xpose.msra.mxu0 0.0
        %797 = vmatprep.subr.mxu0 0.0
        %798 = vmatpush1.xpose.msra.mxu0 0.0
        %799 = vmatprep.subr.mxu0 0.0
        %800 = vmatpush1.xpose.msra.mxu0 0.0
        %801 = vmatprep.subr.mxu0 0.0
        %802 = vmatpush1.xpose.msra.mxu0 0.0
        %803 = vmatprep.subr.mxu0 0.0
        %804 = vmatpush1.xpose.msra.mxu0 0.0
        %805 = vmatprep.subr.mxu0 0.0
        %806 = vmatpush1.xpose.msra.mxu0 0.0
        %807 = vmatprep.subr.mxu0 0.0
        %808 = vmatpush1.xpose.msra.mxu0 0.0
        %809 = vmatprep.subr.mxu0 0.0
        %810 = vmatpush1.xpose.msra.mxu0 0.0
        %811 = vmatprep.subr.mxu0 0.0
        %812 = vmatpush1.xpose.msra.mxu0 0.0
        %813 = vmatprep.subr.mxu0 0.0
        %814 = vmatpush1.xpose.msra.mxu0 0.0
        %815 = vmatprep.subr.mxu0 0.0
        %816 = vmatpush1.xpose.msra.mxu0 0.0
        %817 = vmatprep.subr.mxu0 0.0
        %818 = vmatpush1.xpose.msra.mxu0 0.0
        %819 = vmatprep.subr.mxu0 0.0
        %820 = vmatpush1.xpose.msra.mxu0 0.0
        %821 = vmatprep.subr.mxu0 0.0
        %822 = vmatpush1.xpose.msra.mxu0 0.0
        %823 = vmatprep.mubr.f32.mxu0 0.0
        %824 = vmatmul.mubr.f32.gmra.mrb[0].mxu0 %v755
        %v825 = vpop.f32.mrb[0].mxu0
        %v826 = vadd.f32 0.0, %v825
        %v827 = vpop.f32.mrb[0].mxu0
        %828 = vdwg.mxu0
        %v829 = vsel %vm532, %v604, -inf
        %830 = vmax.xlane.f32.xlu0 %v829
        %v831 = vpop.xlane.xlu0 %830
        %v832 = vsel %vm532, %v678, -inf
        %833 = vmax.xlane.f32.xlu0 %v832
        %v834 = vpop.xlane.xlu0 %833
        %v835 = vsel %vm532, %v752, -inf
        %836 = vmax.xlane.f32.xlu0 %v835
        %v837 = vpop.xlane.xlu0 %836
        %v838 = vsel %vm532, %v826, -inf
        %839 = vmax.xlane.f32.xlu0 %v838
        %v840 = vpop.xlane.xlu0 %839
        %v841 = vsub.f32 %v604, %v831
        %v842 = vsub.f32 %v678, %v834
        %v843 = vsub.f32 %v752, %v837
        %v844 = vsub.f32 %v826, %v840
        %v845 = vmul.f32 %v841, 1.442695
        %v846 = vpow.pop %v845
        %v847 = vmul.f32 %v842, 1.442695
        %v848 = vpow.pop %v847
        %v849 = vmul.f32 %v843, 1.442695
        %v850 = vpow.pop %v849
        %v851 = vmul.f32 %v844, 1.442695
        %v852 = vpow.pop %v851
        %v853 = vsel %vm532, %v846, 0.0
        %854 = vadd.xlane.f32.xlu0 %v853
        %v855 = vpop.xlane.xlu0 %854
        %v856 = vsel %vm532, %v848, 0.0
        %857 = vadd.xlane.f32.xlu0 %v856
        %v858 = vpop.xlane.xlu0 %857
        %v859 = vsel %vm532, %v850, 0.0
        %860 = vadd.xlane.f32.xlu0 %v859
        %v861 = vpop.xlane.xlu0 %860
        %v862 = vsel %vm532, %v852, 0.0
        %863 = vadd.xlane.f32.xlu0 %v862
        %v864 = vpop.xlane.xlu0 %863
        %v865 = vrcp.pop %v855
        %v866 = vrcp.pop %v858
        %v867 = vrcp.pop %v861
        %v868 = vrcp.pop %v864
        %v869 = vmul.f32 %v846, %v865
        %v870 = vmul.f32 %v848, %v866
        %v871 = vmul.f32 %v850, %v867
        %v872 = vmul.f32 %v852, %v868
        %v874 = vsel %vm532, %v869, 0
        %876 = vmatprep.subr.mxu0 0.0
        %877 = vmatpush1.msra.mxu0 %v505
        %878 = vmatprep.subr.mxu0 0.0
        %879 = vmatpush1.msra.mxu0 0.0
        %880 = vmatprep.subr.mxu0 0.0
        %881 = vmatpush1.msra.mxu0 0.0
        %882 = vmatprep.subr.mxu0 0.0
        %883 = vmatpush1.msra.mxu0 0.0
        %884 = vmatprep.subr.mxu0 0.0
        %885 = vmatpush1.msra.mxu0 0.0
        %886 = vmatprep.subr.mxu0 0.0
        %887 = vmatpush1.msra.mxu0 0.0
        %888 = vmatprep.subr.mxu0 0.0
        %889 = vmatpush1.msra.mxu0 0.0
        %890 = vmatprep.subr.mxu0 0.0
        %891 = vmatpush1.msra.mxu0 0.0
        %892 = vmatprep.subr.mxu0 0.0
        %893 = vmatpush1.msra.mxu0 0.0
        %894 = vmatprep.subr.mxu0 0.0
        %895 = vmatpush1.msra.mxu0 0.0
        %896 = vmatprep.subr.mxu0 0.0
        %897 = vmatpush1.msra.mxu0 0.0
        %898 = vmatprep.subr.mxu0 0.0
        %899 = vmatpush1.msra.mxu0 0.0
        %900 = vmatprep.subr.mxu0 0.0
        %901 = vmatpush1.msra.mxu0 0.0
        %902 = vmatprep.subr.mxu0 0.0
        %903 = vmatpush1.msra.mxu0 0.0
        %904 = vmatprep.subr.mxu0 0.0
        %905 = vmatpush1.msra.mxu0 0.0
        %906 = vmatprep.subr.mxu0 0.0
        %907 = vmatpush1.msra.mxu0 0.0
        %908 = vmatprep.subr.mxu0 0.0
        %909 = vmatpush1.msra.mxu0 0.0
        %910 = vmatprep.subr.mxu0 0.0
        %911 = vmatpush1.msra.mxu0 0.0
        %912 = vmatprep.subr.mxu0 0.0
        %913 = vmatpush1.msra.mxu0 0.0
        %914 = vmatprep.subr.mxu0 0.0
        %915 = vmatpush1.msra.mxu0 0.0
        %916 = vmatprep.subr.mxu0 0.0
        %917 = vmatpush1.msra.mxu0 0.0
        %918 = vmatprep.subr.mxu0 0.0
        %919 = vmatpush1.msra.mxu0 0.0
        %920 = vmatprep.subr.mxu0 0.0
        %921 = vmatpush1.msra.mxu0 0.0
        %922 = vmatprep.subr.mxu0 0.0
        %923 = vmatpush1.msra.mxu0 0.0
        %924 = vmatprep.subr.mxu0 0.0
        %925 = vmatpush1.msra.mxu0 0.0
        %926 = vmatprep.subr.mxu0 0.0
        %927 = vmatpush1.msra.mxu0 0.0
        %928 = vmatprep.subr.mxu0 0.0
        %929 = vmatpush1.msra.mxu0 0.0
        %930 = vmatprep.subr.mxu0 0.0
        %931 = vmatpush1.msra.mxu0 0.0
        %932 = vmatprep.subr.mxu0 0.0
        %933 = vmatpush1.msra.mxu0 0.0
        %934 = vmatprep.subr.mxu0 0.0
        %935 = vmatpush1.msra.mxu0 0.0
        %936 = vmatprep.subr.mxu0 0.0
        %937 = vmatpush1.msra.mxu0 0.0
        %938 = vmatprep.subr.mxu0 0.0
        %939 = vmatpush1.msra.mxu0 0.0
        %940 = vmatprep.mubr.f32.mxu0 0.0
        %941 = vmatmul.mubr.f32.gmra.mrb[0].mxu0 %v874
        %v942 = vpop.f32.mrb[0].mxu0
        %v943 = vadd.f32 0.0, %v942
        %v944 = vpop.f32.mrb[0].mxu0
        %945 = vdwg.mxu0
        %v947 = vsel %vm532, %v870, 0
        %949 = vmatprep.subr.mxu0 0.0
        %950 = vmatpush1.msra.mxu0 %v524
        %951 = vmatprep.subr.mxu0 0.0
        %952 = vmatpush1.msra.mxu0 0.0
        %953 = vmatprep.subr.mxu0 0.0
        %954 = vmatpush1.msra.mxu0 0.0
        %955 = vmatprep.subr.mxu0 0.0
        %956 = vmatpush1.msra.mxu0 0.0
        %957 = vmatprep.subr.mxu0 0.0
        %958 = vmatpush1.msra.mxu0 0.0
        %959 = vmatprep.subr.mxu0 0.0
        %960 = vmatpush1.msra.mxu0 0.0
        %961 = vmatprep.subr.mxu0 0.0
        %962 = vmatpush1.msra.mxu0 0.0
        %963 = vmatprep.subr.mxu0 0.0
        %964 = vmatpush1.msra.mxu0 0.0
        %965 = vmatprep.subr.mxu0 0.0
        %966 = vmatpush1.msra.mxu0 0.0
        %967 = vmatprep.subr.mxu0 0.0
        %968 = vmatpush1.msra.mxu0 0.0
        %969 = vmatprep.subr.mxu0 0.0
        %970 = vmatpush1.msra.mxu0 0.0
        %971 = vmatprep.subr.mxu0 0.0
        %972 = vmatpush1.msra.mxu0 0.0
        %973 = vmatprep.subr.mxu0 0.0
        %974 = vmatpush1.msra.mxu0 0.0
        %975 = vmatprep.subr.mxu0 0.0
        %976 = vmatpush1.msra.mxu0 0.0
        %977 = vmatprep.subr.mxu0 0.0
        %978 = vmatpush1.msra.mxu0 0.0
        %979 = vmatprep.subr.mxu0 0.0
        %980 = vmatpush1.msra.mxu0 0.0
        %981 = vmatprep.subr.mxu0 0.0
        %982 = vmatpush1.msra.mxu0 0.0
        %983 = vmatprep.subr.mxu0 0.0
        %984 = vmatpush1.msra.mxu0 0.0
        %985 = vmatprep.subr.mxu0 0.0
        %986 = vmatpush1.msra.mxu0 0.0
        %987 = vmatprep.subr.mxu0 0.0
        %988 = vmatpush1.msra.mxu0 0.0
        %989 = vmatprep.subr.mxu0 0.0
        %990 = vmatpush1.msra.mxu0 0.0
        %991 = vmatprep.subr.mxu0 0.0
        %992 = vmatpush1.msra.mxu0 0.0
        %993 = vmatprep.subr.mxu0 0.0
        %994 = vmatpush1.msra.mxu0 0.0
        %995 = vmatprep.subr.mxu0 0.0
        %996 = vmatpush1.msra.mxu0 0.0
        %997 = vmatprep.subr.mxu0 0.0
        %998 = vmatpush1.msra.mxu0 0.0
        %999 = vmatprep.subr.mxu0 0.0
        %1000 = vmatpush1.msra.mxu0 0.0
        %1001 = vmatprep.subr.mxu0 0.0
        %1002 = vmatpush1.msra.mxu0 0.0
        %1003 = vmatprep.subr.mxu0 0.0
        %1004 = vmatpush1.msra.mxu0 0.0
        %1005 = vmatprep.subr.mxu0 0.0
        %1006 = vmatpush1.msra.mxu0 0.0
        %1007 = vmatprep.subr.mxu0 0.0
        %1008 = vmatpush1.msra.mxu0 0.0
        %1009 = vmatprep.subr.mxu0 0.0
        %1010 = vmatpush1.msra.mxu0 0.0
        %1011 = vmatprep.subr.mxu0 0.0
        %1012 = vmatpush1.msra.mxu0 0.0
        %1013 = vmatprep.mubr.f32.mxu0 0.0
        %1014 = vmatmul.mubr.f32.gmra.mrb[0].mxu0 %v947
        %v1015 = vpop.f32.mrb[0].mxu0
        %v1016 = vadd.f32 0.0, %v1015
        %v1017 = vpop.f32.mrb[0].mxu0
        %1018 = vdwg.mxu0
        %v1020 = vsel %vm532, %v871, 0
        %1022 = vmatprep.subr.mxu0 0.0
        %1023 = vmatpush1.msra.mxu0 %v527
        %1024 = vmatprep.subr.mxu0 0.0
        %1025 = vmatpush1.msra.mxu0 0.0
        %1026 = vmatprep.subr.mxu0 0.0
        %1027 = vmatpush1.msra.mxu0 0.0
        %1028 = vmatprep.subr.mxu0 0.0
        %1029 = vmatpush1.msra.mxu0 0.0
        %1030 = vmatprep.subr.mxu0 0.0
        %1031 = vmatpush1.msra.mxu0 0.0
        %1032 = vmatprep.subr.mxu0 0.0
        %1033 = vmatpush1.msra.mxu0 0.0
        %1034 = vmatprep.subr.mxu0 0.0
        %1035 = vmatpush1.msra.mxu0 0.0
        %1036 = vmatprep.subr.mxu0 0.0
        %1037 = vmatpush1.msra.mxu0 0.0
        %1038 = vmatprep.subr.mxu0 0.0
        %1039 = vmatpush1.msra.mxu0 0.0
        %1040 = vmatprep.subr.mxu0 0.0
        %1041 = vmatpush1.msra.mxu0 0.0
        %1042 = vmatprep.subr.mxu0 0.0
        %1043 = vmatpush1.msra.mxu0 0.0
        %1044 = vmatprep.subr.mxu0 0.0
        %1045 = vmatpush1.msra.mxu0 0.0
        %1046 = vmatprep.subr.mxu0 0.0
        %1047 = vmatpush1.msra.mxu0 0.0
        %1048 = vmatprep.subr.mxu0 0.0
        %1049 = vmatpush1.msra.mxu0 0.0
        %1050 = vmatprep.subr.mxu0 0.0
        %1051 = vmatpush1.msra.mxu0 0.0
        %1052 = vmatprep.subr.mxu0 0.0
        %1053 = vmatpush1.msra.mxu0 0.0
        %1054 = vmatprep.subr.mxu0 0.0
        %1055 = vmatpush1.msra.mxu0 0.0
        %1056 = vmatprep.subr.mxu0 0.0
        %1057 = vmatpush1.msra.mxu0 0.0
        %1058 = vmatprep.subr.mxu0 0.0
        %1059 = vmatpush1.msra.mxu0 0.0
        %1060 = vmatprep.subr.mxu0 0.0
        %1061 = vmatpush1.msra.mxu0 0.0
        %1062 = vmatprep.subr.mxu0 0.0
        %1063 = vmatpush1.msra.mxu0 0.0
        %1064 = vmatprep.subr.mxu0 0.0
        %1065 = vmatpush1.msra.mxu0 0.0
        %1066 = vmatprep.subr.mxu0 0.0
        %1067 = vmatpush1.msra.mxu0 0.0
        %1068 = vmatprep.subr.mxu0 0.0
        %1069 = vmatpush1.msra.mxu0 0.0
        %1070 = vmatprep.subr.mxu0 0.0
        %1071 = vmatpush1.msra.mxu0 0.0
        %1072 = vmatprep.subr.mxu0 0.0
        %1073 = vmatpush1.msra.mxu0 0.0
        %1074 = vmatprep.subr.mxu0 0.0
        %1075 = vmatpush1.msra.mxu0 0.0
        %1076 = vmatprep.subr.mxu0 0.0
        %1077 = vmatpush1.msra.mxu0 0.0
        %1078 = vmatprep.subr.mxu0 0.0
        %1079 = vmatpush1.msra.mxu0 0.0
        %1080 = vmatprep.subr.mxu0 0.0
        %1081 = vmatpush1.msra.mxu0 0.0
        %1082 = vmatprep.subr.mxu0 0.0
        %1083 = vmatpush1.msra.mxu0 0.0
        %1084 = vmatprep.subr.mxu0 0.0
        %1085 = vmatpush1.msra.mxu0 0.0
        %1086 = vmatprep.mubr.f32.mxu0 0.0
        %1087 = vmatmul.mubr.f32.gmra.mrb[0].mxu0 %v1020
        %v1088 = vpop.f32.mrb[0].mxu0
        %v1089 = vadd.f32 0.0, %v1088
        %v1090 = vpop.f32.mrb[0].mxu0
        %1091 = vdwg.mxu0
        %v1093 = vsel %vm532, %v872, 0
        %1095 = vmatprep.subr.mxu0 0.0
        %1096 = vmatpush1.msra.mxu0 %v530
        %1097 = vmatprep.subr.mxu0 0.0
        %1098 = vmatpush1.msra.mxu0 0.0
        %1099 = vmatprep.subr.mxu0 0.0
        %1100 = vmatpush1.msra.mxu0 0.0
        %1101 = vmatprep.subr.mxu0 0.0
        %1102 = vmatpush1.msra.mxu0 0.0
        %1103 = vmatprep.subr.mxu0 0.0
        %1104 = vmatpush1.msra.mxu0 0.0
        %1105 = vmatprep.subr.mxu0 0.0
        %1106 = vmatpush1.msra.mxu0 0.0
        %1107 = vmatprep.subr.mxu0 0.0
        %1108 = vmatpush1.msra.mxu0 0.0
        %1109 = vmatprep.subr.mxu0 0.0
        %1110 = vmatpush1.msra.mxu0 0.0
        %1111 = vmatprep.subr.mxu0 0.0
        %1112 = vmatpush1.msra.mxu0 0.0
        %1113 = vmatprep.subr.mxu0 0.0
        %1114 = vmatpush1.msra.mxu0 0.0
        %1115 = vmatprep.subr.mxu0 0.0
        %1116 = vmatpush1.msra.mxu0 0.0
        %1117 = vmatprep.subr.mxu0 0.0
        %1118 = vmatpush1.msra.mxu0 0.0
        %1119 = vmatprep.subr.mxu0 0.0
        %1120 = vmatpush1.msra.mxu0 0.0
        %1121 = vmatprep.subr.mxu0 0.0
        %1122 = vmatpush1.msra.mxu0 0.0
        %1123 = vmatprep.subr.mxu0 0.0
        %1124 = vmatpush1.msra.mxu0 0.0
        %1125 = vmatprep.subr.mxu0 0.0
        %1126 = vmatpush1.msra.mxu0 0.0
        %1127 = vmatprep.subr.mxu0 0.0
        %1128 = vmatpush1.msra.mxu0 0.0
        %1129 = vmatprep.subr.mxu0 0.0
        %1130 = vmatpush1.msra.mxu0 0.0
        %1131 = vmatprep.subr.mxu0 0.0
        %1132 = vmatpush1.msra.mxu0 0.0
        %1133 = vmatprep.subr.mxu0 0.0
        %1134 = vmatpush1.msra.mxu0 0.0
        %1135 = vmatprep.subr.mxu0 0.0
        %1136 = vmatpush1.msra.mxu0 0.0
        %1137 = vmatprep.subr.mxu0 0.0
        %1138 = vmatpush1.msra.mxu0 0.0
        %1139 = vmatprep.subr.mxu0 0.0
        %1140 = vmatpush1.msra.mxu0 0.0
        %1141 = vmatprep.subr.mxu0 0.0
        %1142 = vmatpush1.msra.mxu0 0.0
        %1143 = vmatprep.subr.mxu0 0.0
        %1144 = vmatpush1.msra.mxu0 0.0
        %1145 = vmatprep.subr.mxu0 0.0
        %1146 = vmatpush1.msra.mxu0 0.0
        %1147 = vmatprep.subr.mxu0 0.0
        %1148 = vmatpush1.msra.mxu0 0.0
        %1149 = vmatprep.subr.mxu0 0.0
        %1150 = vmatpush1.msra.mxu0 0.0
        %1151 = vmatprep.subr.mxu0 0.0
        %1152 = vmatpush1.msra.mxu0 0.0
        %1153 = vmatprep.subr.mxu0 0.0
        %1154 = vmatpush1.msra.mxu0 0.0
        %1155 = vmatprep.subr.mxu0 0.0
        %1156 = vmatpush1.msra.mxu0 0.0
        %1157 = vmatprep.subr.mxu0 0.0
        %1158 = vmatpush1.msra.mxu0 0.0
        %1159 = vmatprep.mubr.f32.mxu0 0.0
        %1160 = vmatmul.mubr.f32.gmra.mrb[0].mxu0 %v1093
        %v1161 = vpop.f32.mrb[0].mxu0
        %v1162 = vadd.f32 0.0, %v1161
        %v1163 = vpop.f32.mrb[0].mxu0
        %1164 = vdwg.mxu0
        %v1165 = vld [vmem:[%s2 + $0x58] sm:$0xff]
        %v1166 = vld [vmem:[%s2 + $0x60] sm:$0xff]
        %v1167 = vld [vmem:[%s2 + $0x68] sm:$0xff]
        %v1168 = vld [vmem:[%s2 + $0x70] sm:$0xff]
        %v1169 = vld [vmem:[%s2 + $0xdc] sm:$0x1]
        %v1171 = vsel %vm532, %v943, 0
        %1173 = vmatprep.subr.mxu0 0.0
        %1174 = vmatpush1.msra.mxu0 %v1165
        %1175 = vmatprep.subr.mxu0 0.0
        %1176 = vmatpush1.msra.mxu0 0.0
        %1177 = vmatprep.subr.mxu0 0.0
        %1178 = vmatpush1.msra.mxu0 0.0
        %1179 = vmatprep.subr.mxu0 0.0
        %1180 = vmatpush1.msra.mxu0 0.0
        %1181 = vmatprep.subr.mxu0 0.0
        %1182 = vmatpush1.msra.mxu0 0.0
        %1183 = vmatprep.subr.mxu0 0.0
        %1184 = vmatpush1.msra.mxu0 0.0
        %1185 = vmatprep.subr.mxu0 0.0
        %1186 = vmatpush1.msra.mxu0 0.0
        %1187 = vmatprep.subr.mxu0 0.0
        %1188 = vmatpush1.msra.mxu0 0.0
        %1189 = vmatprep.subr.mxu0 0.0
        %1190 = vmatpush1.msra.mxu0 0.0
        %1191 = vmatprep.subr.mxu0 0.0
        %1192 = vmatpush1.msra.mxu0 0.0
        %1193 = vmatprep.subr.mxu0 0.0
        %1194 = vmatpush1.msra.mxu0 0.0
        %1195 = vmatprep.subr.mxu0 0.0
        %1196 = vmatpush1.msra.mxu0 0.0
        %1197 = vmatprep.subr.mxu0 0.0
        %1198 = vmatpush1.msra.mxu0 0.0
        %1199 = vmatprep.subr.mxu0 0.0
        %1200 = vmatpush1.msra.mxu0 0.0
        %1201 = vmatprep.subr.mxu0 0.0
        %1202 = vmatpush1.msra.mxu0 0.0
        %1203 = vmatprep.subr.mxu0 0.0
        %1204 = vmatpush1.msra.mxu0 0.0
        %1205 = vmatprep.subr.mxu0 0.0
        %1206 = vmatpush1.msra.mxu0 0.0
        %1207 = vmatprep.subr.mxu0 0.0
        %1208 = vmatpush1.msra.mxu0 0.0
        %1209 = vmatprep.subr.mxu0 0.0
        %1210 = vmatpush1.msra.mxu0 0.0
        %1211 = vmatprep.subr.mxu0 0.0
        %1212 = vmatpush1.msra.mxu0 0.0
        %1213 = vmatprep.subr.mxu0 0.0
        %1214 = vmatpush1.msra.mxu0 0.0
        %1215 = vmatprep.subr.mxu0 0.0
        %1216 = vmatpush1.msra.mxu0 0.0
        %1217 = vmatprep.subr.mxu0 0.0
        %1218 = vmatpush1.msra.mxu0 0.0
        %1219 = vmatprep.subr.mxu0 0.0
        %1220 = vmatpush1.msra.mxu0 0.0
        %1221 = vmatprep.subr.mxu0 0.0
        %1222 = vmatpush1.msra.mxu0 0.0
        %1223 = vmatprep.subr.mxu0 0.0
        %1224 = vmatpush1.msra.mxu0 0.0
        %1225 = vmatprep.subr.mxu0 0.0
        %1226 = vmatpush1.msra.mxu0 0.0
        %1227 = vmatprep.subr.mxu0 0.0
        %1228 = vmatpush1.msra.mxu0 0.0
        %1229 = vmatprep.subr.mxu0 0.0
        %1230 = vmatpush1.msra.mxu0 0.0
        %1231 = vmatprep.subr.mxu0 0.0
        %1232 = vmatpush1.msra.mxu0 0.0
        %1233 = vmatprep.subr.mxu0 0.0
        %1234 = vmatpush1.msra.mxu0 0.0
        %1235 = vmatprep.subr.mxu0 0.0
        %1236 = vmatpush1.msra.mxu0 0.0
        %1237 = vmatprep.mubr.f32.mxu0 0.0
        %1238 = vmatmul.mubr.f32.gmra.mrb[0].mxu0 %v1171
        %v1239 = vpop.f32.mrb[0].mxu0
        %v1240 = vadd.f32 0.0, %v1239
        %v1241 = vpop.f32.mrb[0].mxu0
        %1242 = vdwg.mxu0
        %v1243 = vlaneseq
        %v1244 = vshrl.u32 %v1243, 7
        %v1245 = vsub.s32 0, %v1244
        %v1246 = vrot.slane %v1169, %v1245
        %v1247 = vadd.f32 %v1246, %v1240
        %v1249 = vsel %vm532, %v1016, 0
        %1251 = vmatprep.subr.mxu0 0.0
        %1252 = vmatpush1.msra.mxu0 %v1166
        %1253 = vmatprep.subr.mxu0 0.0
        %1254 = vmatpush1.msra.mxu0 0.0
        %1255 = vmatprep.subr.mxu0 0.0
        %1256 = vmatpush1.msra.mxu0 0.0
        %1257 = vmatprep.subr.mxu0 0.0
        %1258 = vmatpush1.msra.mxu0 0.0
        %1259 = vmatprep.subr.mxu0 0.0
        %1260 = vmatpush1.msra.mxu0 0.0
        %1261 = vmatprep.subr.mxu0 0.0
        %1262 = vmatpush1.msra.mxu0 0.0
        %1263 = vmatprep.subr.mxu0 0.0
        %1264 = vmatpush1.msra.mxu0 0.0
        %1265 = vmatprep.subr.mxu0 0.0
        %1266 = vmatpush1.msra.mxu0 0.0
        %1267 = vmatprep.subr.mxu0 0.0
        %1268 = vmatpush1.msra.mxu0 0.0
        %1269 = vmatprep.subr.mxu0 0.0
        %1270 = vmatpush1.msra.mxu0 0.0
        %1271 = vmatprep.subr.mxu0 0.0
        %1272 = vmatpush1.msra.mxu0 0.0
        %1273 = vmatprep.subr.mxu0 0.0
        %1274 = vmatpush1.msra.mxu0 0.0
        %1275 = vmatprep.subr.mxu0 0.0
        %1276 = vmatpush1.msra.mxu0 0.0
        %1277 = vmatprep.subr.mxu0 0.0
        %1278 = vmatpush1.msra.mxu0 0.0
        %1279 = vmatprep.subr.mxu0 0.0
        %1280 = vmatpush1.msra.mxu0 0.0
        %1281 = vmatprep.subr.mxu0 0.0
        %1282 = vmatpush1.msra.mxu0 0.0
        %1283 = vmatprep.subr.mxu0 0.0
        %1284 = vmatpush1.msra.mxu0 0.0
        %1285 = vmatprep.subr.mxu0 0.0
        %1286 = vmatpush1.msra.mxu0 0.0
        %1287 = vmatprep.subr.mxu0 0.0
        %1288 = vmatpush1.msra.mxu0 0.0
        %1289 = vmatprep.subr.mxu0 0.0
        %1290 = vmatpush1.msra.mxu0 0.0
        %1291 = vmatprep.subr.mxu0 0.0
        %1292 = vmatpush1.msra.mxu0 0.0
        %1293 = vmatprep.subr.mxu0 0.0
        %1294 = vmatpush1.msra.mxu0 0.0
        %1295 = vmatprep.subr.mxu0 0.0
        %1296 = vmatpush1.msra.mxu0 0.0
        %1297 = vmatprep.subr.mxu0 0.0
        %1298 = vmatpush1.msra.mxu0 0.0
        %1299 = vmatprep.subr.mxu0 0.0
        %1300 = vmatpush1.msra.mxu0 0.0
        %1301 = vmatprep.subr.mxu0 0.0
        %1302 = vmatpush1.msra.mxu0 0.0
        %1303 = vmatprep.subr.mxu0 0.0
        %1304 = vmatpush1.msra.mxu0 0.0
        %1305 = vmatprep.subr.mxu0 0.0
        %1306 = vmatpush1.msra.mxu0 0.0
        %1307 = vmatprep.subr.mxu0 0.0
        %1308 = vmatpush1.msra.mxu0 0.0
        %1309 = vmatprep.subr.mxu0 0.0
        %1310 = vmatpush1.msra.mxu0 0.0
        %1311 = vmatprep.subr.mxu0 0.0
        %1312 = vmatpush1.msra.mxu0 0.0
        %1313 = vmatprep.subr.mxu0 0.0
        %1314 = vmatpush1.msra.mxu0 0.0
        %1315 = vmatprep.mubr.f32.mxu0 0.0
        %1316 = vmatmul.mubr.f32.gmra.mrb[0].mxu0 %v1249
        %v1317 = vpop.f32.mrb[0].mxu0
        %v1318 = vadd.f32 0.0, %v1317
        %v1319 = vpop.f32.mrb[0].mxu0
        %1320 = vdwg.mxu0
        %v1321 = vadd.f32 %v1247, %v1318
        %v1323 = vsel %vm532, %v1089, 0
        %1325 = vmatprep.subr.mxu0 0.0
        %1326 = vmatpush1.msra.mxu0 %v1167
        %1327 = vmatprep.subr.mxu0 0.0
        %1328 = vmatpush1.msra.mxu0 0.0
        %1329 = vmatprep.subr.mxu0 0.0
        %1330 = vmatpush1.msra.mxu0 0.0
        %1331 = vmatprep.subr.mxu0 0.0
        %1332 = vmatpush1.msra.mxu0 0.0
        %1333 = vmatprep.subr.mxu0 0.0
        %1334 = vmatpush1.msra.mxu0 0.0
        %1335 = vmatprep.subr.mxu0 0.0
        %1336 = vmatpush1.msra.mxu0 0.0
        %1337 = vmatprep.subr.mxu0 0.0
        %1338 = vmatpush1.msra.mxu0 0.0
        %1339 = vmatprep.subr.mxu0 0.0
        %1340 = vmatpush1.msra.mxu0 0.0
        %1341 = vmatprep.subr.mxu0 0.0
        %1342 = vmatpush1.msra.mxu0 0.0
        %1343 = vmatprep.subr.mxu0 0.0
        %1344 = vmatpush1.msra.mxu0 0.0
        %1345 = vmatprep.subr.mxu0 0.0
        %1346 = vmatpush1.msra.mxu0 0.0
        %1347 = vmatprep.subr.mxu0 0.0
        %1348 = vmatpush1.msra.mxu0 0.0
        %1349 = vmatprep.subr.mxu0 0.0
        %1350 = vmatpush1.msra.mxu0 0.0
        %1351 = vmatprep.subr.mxu0 0.0
        %1352 = vmatpush1.msra.mxu0 0.0
        %1353 = vmatprep.subr.mxu0 0.0
        %1354 = vmatpush1.msra.mxu0 0.0
        %1355 = vmatprep.subr.mxu0 0.0
        %1356 = vmatpush1.msra.mxu0 0.0
        %1357 = vmatprep.subr.mxu0 0.0
        %1358 = vmatpush1.msra.mxu0 0.0
        %1359 = vmatprep.subr.mxu0 0.0
        %1360 = vmatpush1.msra.mxu0 0.0
        %1361 = vmatprep.subr.mxu0 0.0
        %1362 = vmatpush1.msra.mxu0 0.0
        %1363 = vmatprep.subr.mxu0 0.0
        %1364 = vmatpush1.msra.mxu0 0.0
        %1365 = vmatprep.subr.mxu0 0.0
        %1366 = vmatpush1.msra.mxu0 0.0
        %1367 = vmatprep.subr.mxu0 0.0
        %1368 = vmatpush1.msra.mxu0 0.0
        %1369 = vmatprep.subr.mxu0 0.0
        %1370 = vmatpush1.msra.mxu0 0.0
        %1371 = vmatprep.subr.mxu0 0.0
        %1372 = vmatpush1.msra.mxu0 0.0
        %1373 = vmatprep.subr.mxu0 0.0
        %1374 = vmatpush1.msra.mxu0 0.0
        %1375 = vmatprep.subr.mxu0 0.0
        %1376 = vmatpush1.msra.mxu0 0.0
        %1377 = vmatprep.subr.mxu0 0.0
        %1378 = vmatpush1.msra.mxu0 0.0
        %1379 = vmatprep.subr.mxu0 0.0
        %1380 = vmatpush1.msra.mxu0 0.0
        %1381 = vmatprep.subr.mxu0 0.0
        %1382 = vmatpush1.msra.mxu0 0.0
        %1383 = vmatprep.subr.mxu0 0.0
        %1384 = vmatpush1.msra.mxu0 0.0
        %1385 = vmatprep.subr.mxu0 0.0
        %1386 = vmatpush1.msra.mxu0 0.0
        %1387 = vmatprep.subr.mxu0 0.0
        %1388 = vmatpush1.msra.mxu0 0.0
        %1389 = vmatprep.mubr.f32.mxu0 0.0
        %1390 = vmatmul.mubr.f32.gmra.mrb[0].mxu0 %v1323
        %v1391 = vpop.f32.mrb[0].mxu0
        %v1392 = vadd.f32 0.0, %v1391
        %v1393 = vpop.f32.mrb[0].mxu0
        %1394 = vdwg.mxu0
        %v1395 = vadd.f32 %v1321, %v1392
        %v1397 = vsel %vm532, %v1162, 0
        %1399 = vmatprep.subr.mxu0 0.0
        %1400 = vmatpush1.msra.mxu0 %v1168
        %1401 = vmatprep.subr.mxu0 0.0
        %1402 = vmatpush1.msra.mxu0 0.0
        %1403 = vmatprep.subr.mxu0 0.0
        %1404 = vmatpush1.msra.mxu0 0.0
        %1405 = vmatprep.subr.mxu0 0.0
        %1406 = vmatpush1.msra.mxu0 0.0
        %1407 = vmatprep.subr.mxu0 0.0
        %1408 = vmatpush1.msra.mxu0 0.0
        %1409 = vmatprep.subr.mxu0 0.0
        %1410 = vmatpush1.msra.mxu0 0.0
        %1411 = vmatprep.subr.mxu0 0.0
        %1412 = vmatpush1.msra.mxu0 0.0
        %1413 = vmatprep.subr.mxu0 0.0
        %1414 = vmatpush1.msra.mxu0 0.0
        %1415 = vmatprep.subr.mxu0 0.0
        %1416 = vmatpush1.msra.mxu0 0.0
        %1417 = vmatprep.subr.mxu0 0.0
        %1418 = vmatpush1.msra.mxu0 0.0
        %1419 = vmatprep.subr.mxu0 0.0
        %1420 = vmatpush1.msra.mxu0 0.0
        %1421 = vmatprep.subr.mxu0 0.0
        %1422 = vmatpush1.msra.mxu0 0.0
        %1423 = vmatprep.subr.mxu0 0.0
        %1424 = vmatpush1.msra.mxu0 0.0
        %1425 = vmatprep.subr.mxu0 0.0
        %1426 = vmatpush1.msra.mxu0 0.0
        %1427 = vmatprep.subr.mxu0 0.0
        %1428 = vmatpush1.msra.mxu0 0.0
        %1429 = vmatprep.subr.mxu0 0.0
        %1430 = vmatpush1.msra.mxu0 0.0
        %1431 = vmatprep.subr.mxu0 0.0
        %1432 = vmatpush1.msra.mxu0 0.0
        %1433 = vmatprep.subr.mxu0 0.0
        %1434 = vmatpush1.msra.mxu0 0.0
        %1435 = vmatprep.subr.mxu0 0.0
        %1436 = vmatpush1.msra.mxu0 0.0
        %1437 = vmatprep.subr.mxu0 0.0
        %1438 = vmatpush1.msra.mxu0 0.0
        %1439 = vmatprep.subr.mxu0 0.0
        %1440 = vmatpush1.msra.mxu0 0.0
        %1441 = vmatprep.subr.mxu0 0.0
        %1442 = vmatpush1.msra.mxu0 0.0
        %1443 = vmatprep.subr.mxu0 0.0
        %1444 = vmatpush1.msra.mxu0 0.0
        %1445 = vmatprep.subr.mxu0 0.0
        %1446 = vmatpush1.msra.mxu0 0.0
        %1447 = vmatprep.subr.mxu0 0.0
        %1448 = vmatpush1.msra.mxu0 0.0
        %1449 = vmatprep.subr.mxu0 0.0
        %1450 = vmatpush1.msra.mxu0 0.0
        %1451 = vmatprep.subr.mxu0 0.0
        %1452 = vmatpush1.msra.mxu0 0.0
        %1453 = vmatprep.subr.mxu0 0.0
        %1454 = vmatpush1.msra.mxu0 0.0
        %1455 = vmatprep.subr.mxu0 0.0
        %1456 = vmatpush1.msra.mxu0 0.0
        %1457 = vmatprep.subr.mxu0 0.0
        %1458 = vmatpush1.msra.mxu0 0.0
        %1459 = vmatprep.subr.mxu0 0.0
        %1460 = vmatpush1.msra.mxu0 0.0
        %1461 = vmatprep.subr.mxu0 0.0
        %1462 = vmatpush1.msra.mxu0 0.0
        %1463 = vmatprep.mubr.f32.mxu0 0.0
        %1464 = vmatmul.mubr.f32.gmra.mrb[0].mxu0 %v1397
        %v1465 = vpop.f32.mrb[0].mxu0
        %v1466 = vadd.f32 0.0, %v1465
        %v1467 = vpop.f32.mrb[0].mxu0
        %1468 = vdwg.mxu0
        %v1469 = vadd.f32 %v1395, %v1466
        %v1470 = vld [vmem:[%s2 + $0xdd] sm:$0x1]
        %v1471 = vld [vmem:[%s2 + $0xde] sm:$0x1]
        %v1472 = vadd.f32 %v264, %v1469
        %v1473 = vsel %vm276, %v1472, 0.0
        %1474 = vadd.xlane.f32.xlu0 %v1473
        %v1475 = vpop.xlane.xlu0 %1474
        %v1476 = vrcp.pop 32.0
        %v1477 = vmul.f32 %v1475, %v1476
        %v1478 = vsub.f32 %v1472, %v1477
        %v1479 = vmul.f32 %v1478, %v1478
        %v1480 = vsel %vm276, %v1479, 0.0
        %1481 = vadd.xlane.f32.xlu0 %v1480
        %v1482 = vpop.xlane.xlu0 %1481
        %v1483 = vmul.f32 %v1482, %v1476
        %v1484 = vadd.f32 %v1483, 1e-05
        %v1485 = vrsqrt.pop %v1484
        %v1486 = vmul.f32 %v1478, %v1485
        %v1487 = vlaneseq
        %v1488 = vshrl.u32 %v1487, 7
        %v1489 = vsub.s32 0, %v1488
        %v1490 = vrot.slane %v1470, %v1489
        %v1491 = vmul.f32 %v1486, %v1490
        %v1492 = vlaneseq
        %v1493 = vshrl.u32 %v1492, 7
        %v1494 = vsub.s32 0, %v1493
        %v1495 = vrot.slane %v1471, %v1494
        %v1496 = vadd.f32 %v1491, %v1495
        %v1497 = vld [vmem:[%s2 + $0x78] sm:$0xff]
        %v1498 = vld [vmem:[%s2 + $0x80] sm:$0xff]
        %v1499 = vld [vmem:[%s2 + $0x88] sm:$0xff]
        %v1500 = vld [vmem:[%s2 + $0x90] sm:$0xff]
        %v1501 = vld [vmem:[%s2 + $0xdf] sm:$0x1]
        %v1502 = vlaneseq
        %v1503 = vshrl.u32 %v1502, 7
        %v1504 = vsub.s32 0, %v1503
        %v1505 = vrot.slane %v1501, %v1504
        %v1507 = vsel %vm276, %v1496, 0
        %1509 = vmatprep.subr.mxu0 0.0
        %1510 = vmatpush1.msra.mxu0 %v1497
        %1511 = vmatprep.subr.mxu0 0.0
        %1512 = vmatpush1.msra.mxu0 %v1498
        %1513 = vmatprep.subr.mxu0 0.0
        %1514 = vmatpush1.msra.mxu0 %v1499
        %1515 = vmatprep.subr.mxu0 0.0
        %1516 = vmatpush1.msra.mxu0 %v1500
        %1517 = vmatprep.subr.mxu0 0.0
        %1518 = vmatpush1.msra.mxu0 0.0
        %1519 = vmatprep.subr.mxu0 0.0
        %1520 = vmatpush1.msra.mxu0 0.0
        %1521 = vmatprep.subr.mxu0 0.0
        %1522 = vmatpush1.msra.mxu0 0.0
        %1523 = vmatprep.subr.mxu0 0.0
        %1524 = vmatpush1.msra.mxu0 0.0
        %1525 = vmatprep.subr.mxu0 0.0
        %1526 = vmatpush1.msra.mxu0 0.0
        %1527 = vmatprep.subr.mxu0 0.0
        %1528 = vmatpush1.msra.mxu0 0.0
        %1529 = vmatprep.subr.mxu0 0.0
        %1530 = vmatpush1.msra.mxu0 0.0
        %1531 = vmatprep.subr.mxu0 0.0
        %1532 = vmatpush1.msra.mxu0 0.0
        %1533 = vmatprep.subr.mxu0 0.0
        %1534 = vmatpush1.msra.mxu0 0.0
        %1535 = vmatprep.subr.mxu0 0.0
        %1536 = vmatpush1.msra.mxu0 0.0
        %1537 = vmatprep.subr.mxu0 0.0
        %1538 = vmatpush1.msra.mxu0 0.0
        %1539 = vmatprep.subr.mxu0 0.0
        %1540 = vmatpush1.msra.mxu0 0.0
        %1541 = vmatprep.subr.mxu0 0.0
        %1542 = vmatpush1.msra.mxu0 0.0
        %1543 = vmatprep.subr.mxu0 0.0
        %1544 = vmatpush1.msra.mxu0 0.0
        %1545 = vmatprep.subr.mxu0 0.0
        %1546 = vmatpush1.msra.mxu0 0.0
        %1547 = vmatprep.subr.mxu0 0.0
        %1548 = vmatpush1.msra.mxu0 0.0
        %1549 = vmatprep.subr.mxu0 0.0
        %1550 = vmatpush1.msra.mxu0 0.0
        %1551 = vmatprep.subr.mxu0 0.0
        %1552 = vmatpush1.msra.mxu0 0.0
        %1553 = vmatprep.subr.mxu0 0.0
        %1554 = vmatpush1.msra.mxu0 0.0
        %1555 = vmatprep.subr.mxu0 0.0
        %1556 = vmatpush1.msra.mxu0 0.0
        %1557 = vmatprep.subr.mxu0 0.0
        %1558 = vmatpush1.msra.mxu0 0.0
        %1559 = vmatprep.subr.mxu0 0.0
        %1560 = vmatpush1.msra.mxu0 0.0
        %1561 = vmatprep.subr.mxu0 0.0
        %1562 = vmatpush1.msra.mxu0 0.0
        %1563 = vmatprep.subr.mxu0 0.0
        %1564 = vmatpush1.msra.mxu0 0.0
        %1565 = vmatprep.subr.mxu0 0.0
        %1566 = vmatpush1.msra.mxu0 0.0
        %1567 = vmatprep.subr.mxu0 0.0
        %1568 = vmatpush1.msra.mxu0 0.0
        %1569 = vmatprep.subr.mxu0 0.0
        %1570 = vmatpush1.msra.mxu0 0.0
        %1571 = vmatprep.subr.mxu0 0.0
        %1572 = vmatpush1.msra.mxu0 0.0
        %1573 = vmatprep.mubr.f32.mxu0 0.0
        %1574 = vmatmul.mubr.f32.gmra.mrb[0].mxu0 %v1507
        %v1575 = vpop.f32.mrb[0].mxu0
        %v1576 = vadd.f32 %v1505, %v1575
        %v1577 = vpop.f32.mrb[0].mxu0
        %1578 = vdwg.mxu0
        %v1579 = vmax.f32 %v1576, 0.0
        %v1580 = vld [vmem:[%s2 + $0x98] sm:$0xff]
        %v1581 = vld [vmem:[%s2 + $0xa0] sm:$0xff]
        %v1582 = vld [vmem:[%s2 + $0xa8] sm:$0xff]
        %v1583 = vld [vmem:[%s2 + $0xb0] sm:$0xff]
        %v1584 = vld [vmem:[%s2 + $0xb8] sm:$0xff]
        %v1585 = vld [vmem:[%s2 + $0xc0] sm:$0xff]
        %v1586 = vld [vmem:[%s2 + $0xc8] sm:$0xff]
        %v1587 = vld [vmem:[%s2 + $0xd0] sm:$0xff]
        %v1588 = vld [vmem:[%s2 + $0xe0] sm:$0x1]
        %v1589 = vlaneseq
        %v1590 = vshrl.u32 %v1589, 7
        %v1591 = vsub.s32 0, %v1590
        %v1592 = vrot.slane %v1588, %v1591
        %vm1593 = vcmask 523264
        %v1595 = vsel %vm1593, %v1579, 0
        %1597 = vmatprep.subr.mxu0 0.0
        %1598 = vmatpush1.msra.mxu0 %v1580
        %1599 = vmatprep.subr.mxu0 0.0
        %1600 = vmatpush1.msra.mxu0 %v1581
        %1601 = vmatprep.subr.mxu0 0.0
        %1602 = vmatpush1.msra.mxu0 %v1582
        %1603 = vmatprep.subr.mxu0 0.0
        %1604 = vmatpush1.msra.mxu0 %v1583
        %1605 = vmatprep.subr.mxu0 0.0
        %1606 = vmatpush1.msra.mxu0 %v1584
        %1607 = vmatprep.subr.mxu0 0.0
        %1608 = vmatpush1.msra.mxu0 %v1585
        %1609 = vmatprep.subr.mxu0 0.0
        %1610 = vmatpush1.msra.mxu0 %v1586
        %1611 = vmatprep.subr.mxu0 0.0
        %1612 = vmatpush1.msra.mxu0 %v1587
        %1613 = vmatprep.subr.mxu0 0.0
        %1614 = vmatpush1.msra.mxu0 0.0
        %1615 = vmatprep.subr.mxu0 0.0
        %1616 = vmatpush1.msra.mxu0 0.0
        %1617 = vmatprep.subr.mxu0 0.0
        %1618 = vmatpush1.msra.mxu0 0.0
        %1619 = vmatprep.subr.mxu0 0.0
        %1620 = vmatpush1.msra.mxu0 0.0
        %1621 = vmatprep.subr.mxu0 0.0
        %1622 = vmatpush1.msra.mxu0 0.0
        %1623 = vmatprep.subr.mxu0 0.0
        %1624 = vmatpush1.msra.mxu0 0.0
        %1625 = vmatprep.subr.mxu0 0.0
        %1626 = vmatpush1.msra.mxu0 0.0
        %1627 = vmatprep.subr.mxu0 0.0
        %1628 = vmatpush1.msra.mxu0 0.0
        %1629 = vmatprep.subr.mxu0 0.0
        %1630 = vmatpush1.msra.mxu0 0.0
        %1631 = vmatprep.subr.mxu0 0.0
        %1632 = vmatpush1.msra.mxu0 0.0
        %1633 = vmatprep.subr.mxu0 0.0
        %1634 = vmatpush1.msra.mxu0 0.0
        %1635 = vmatprep.subr.mxu0 0.0
        %1636 = vmatpush1.msra.mxu0 0.0
        %1637 = vmatprep.subr.mxu0 0.0
        %1638 = vmatpush1.msra.mxu0 0.0
        %1639 = vmatprep.subr.mxu0 0.0
        %1640 = vmatpush1.msra.mxu0 0.0
        %1641 = vmatprep.subr.mxu0 0.0
        %1642 = vmatpush1.msra.mxu0 0.0
        %1643 = vmatprep.subr.mxu0 0.0
        %1644 = vmatpush1.msra.mxu0 0.0
        %1645 = vmatprep.subr.mxu0 0.0
        %1646 = vmatpush1.msra.mxu0 0.0
        %1647 = vmatprep.subr.mxu0 0.0
        %1648 = vmatpush1.msra.mxu0 0.0
        %1649 = vmatprep.subr.mxu0 0.0
        %1650 = vmatpush1.msra.mxu0 0.0
        %1651 = vmatprep.subr.mxu0 0.0
        %1652 = vmatpush1.msra.mxu0 0.0
        %1653 = vmatprep.subr.mxu0 0.0
        %1654 = vmatpush1.msra.mxu0 0.0
        %1655 = vmatprep.subr.mxu0 0.0
        %1656 = vmatpush1.msra.mxu0 0.0
        %1657 = vmatprep.subr.mxu0 0.0
        %1658 = vmatpush1.msra.mxu0 0.0
        %1659 = vmatprep.subr.mxu0 0.0
        %1660 = vmatpush1.msra.mxu0 0.0
        %1661 = vmatprep.mubr.f32.mxu0 0.0
        %1662 = vmatmul.mubr.f32.gmra.mrb[0].mxu0 %v1595
        %v1663 = vpop.f32.mrb[0].mxu0
        %v1664 = vadd.f32 %v1592, %v1663
        %v1665 = vpop.f32.mrb[0].mxu0
        %1666 = vdwg.mxu0
        %v1667 = vadd.f32 %v1496, %v1664
        %v1668 = vsel %vm276, %v1667, 0.0
        %1669 = vadd.xlane.f32.xlu0 %v1668
        %v1670 = vpop.xlane.xlu0 %1669
        %v1671 = vmul.f32 %v1670, %v1476
        %v1672 = vsub.f32 %v1667, %v1671
        %v1673 = vmul.f32 %v1672, %v1672
        %v1674 = vsel %vm276, %v1673, 0.0
        %1675 = vadd.xlane.f32.xlu0 %v1674
        %v1676 = vpop.xlane.xlu0 %1675
        %v1677 = vmul.f32 %v1676, %v1476
        %v1678 = vadd.f32 %v1677, 1e-05
        %v1679 = vrsqrt.pop %v1678
        %v1680 = vmul.f32 %v1672, %v1679
        %v1681 = vmul.f32 %v1680, %v1490
        %v1682 = vadd.f32 %v1681, %v1495
        %1683 = vst.msk [vmem:[%s174] sm:$0xff] %vm276, %v1682
        %s1684 = sand.u32 %s98, 1
        %s1685 = scalar_lea.sflag [#allocation3], %s1684
        %s1686 = sand.u32 %s98, 1
        %s1687 = smul.addr %s1686, 8
        %s1688 = scalar_lea.vmem [#allocation2], %s1687
        // Predicated region
        $region33: #{tpu_custom_call.1} parent=31 // pred_check
          %p1689 = pneg %p108
        $region34: #{tpu_custom_call.1} parent=31 // pred_check_branch
          %1691 = sbr.rel (%p1689) target = $region36
        $region35: #{tpu_custom_call.1} parent=31 // pred_region
          %s1693 = ssub.s32 128, 128
          %1694 = vsyncadd %s1685, %s1693
          %s1695 = smul.addr %s17, 128
          %s1696 = scalar_lea.hbm %s3, %s1695
          %s1698 = sshll.u32 %s1688, 4
          %s1699 = int_to_ptr.vmem [resolvable:$true] %s1698
          %1701 = dma.vmem_to_hbm [thread:$0]  %s1699, 128, %s1696, %s1685
        $region36: #{tpu_custom_call.1} parent=31 // pred_fallthru
          _
      $region32: #{tpu_custom_call.1} parent=5 // pred_fallthru
        _
      %p1702 = scmp.le.s32.totalorder 2, %s12
      // Predicated region
      $region37: #{tpu_custom_call.1} parent=5 // pred_check
        %p1703 = pneg %p1702
      $region38: #{tpu_custom_call.1} parent=5 // pred_check_branch
        %1705 = sbr.rel (%p1703) target = $region40
      $region39: #{tpu_custom_call.1} parent=5 // pred_region
        %s1706 = ssub.s32 %s12, 2
        // Predicated region
        $region41: #{tpu_custom_call.1} parent=39 // pred_check
          %p1707 = pneg %p114
        $region42: #{tpu_custom_call.1} parent=39 // pred_check_branch
          %1709 = sbr.rel (%p1707) target = $region44
        $region43: #{tpu_custom_call.1} parent=39 // pred_region
          %s1710 = sand.u32 %s99, 1
          %s1711 = scalar_lea.sflag [#allocation3], %s1710
          %s1712 = sand.u32 %s99, 1
          %s1713 = smul.addr %s1712, 8
          %s1714 = scalar_lea.vmem [#allocation2], %s1713
          %1715 = dma.done %s1711, 128
        $region44: #{tpu_custom_call.1} parent=39 // pred_fallthru
          _
      $region40: #{tpu_custom_call.1} parent=5 // pred_fallthru
        _
    $region6: #{tpu_custom_call.1} parent=1 // loop_footer
      %s16 = sadd.s32 1, %s12
    $region7: #{tpu_custom_call.1} parent=1 // loop_footer_branch
      %11 = sbr.rel target = $region3
    $region8: #{tpu_custom_call.1} parent=1 // loop_exit
      _
    %1716 = vsyncpa [#allocation3], 1
    %s1717 = scalar_lea.sflag [#allocation3], 1
    %1718 = vsyncpa %s1717, 1

</llo_original>
